<compile_context>
chip_gen: v7x
topology: tpu7x:2x2x1
jax: 0.10.0
libtpu: 0.0.40
codegen_flags: <defaults>
</compile_context>

<pallas_src>
import functools

import jax
import jax.numpy as jnp
import numpy as np
from jax.experimental import pallas as pl
from jax.experimental.pallas import tpu as pltpu

HIDDEN = 16
LANES = 128
SUBLANES = 8


def ivgd_kernel(x_ref, label_ref, lamda_ref,
                w1_ref, b1_ref, w2_ref, b2_ref,
                o0_ref, o1_ref, *, alpha, tau, rho, n_true):
    """All refs except the SMEM scalars are (rows, 128) lane-dense f32 slabs."""
    x1 = x_ref[...]          # P(class 1), padded slots hold 0
    lab1 = label_ref[...]    # label column, padded slots hold 0
    lamda = lamda_ref[0]     # scalar (SMEM)

    rows, lanes = x1.shape

    # Validity mask for the padded tail (node id = row*128 + lane).
    row_ids = jax.lax.broadcasted_iota(jnp.int32, (rows, lanes), 0)
    lane_ids = jax.lax.broadcasted_iota(jnp.int32, (rows, lanes), 1)
    validf = ((row_ids * lanes + lane_ids) < n_true).astype(jnp.float32)

    inv_n = 1.0 / n_true            # label.shape[0] == true node count
    inv_ta = 1.0 / (tau + alpha)

    def msum(v):                    # global sum over valid nodes only
        return jnp.sum(v * validf)

    sum_label = msum(lab1)          # torch.sum(label)
    lab0 = 1.0 - lab1               # label = cat((1-label, label), dim=1)
    x0 = 1.0 - x1                   # x     = cat((1-x,     x),     dim=1)

    def correction(prob, net):
        """ReLU(prob @ W1^T + b1) @ W2^T + b2, unrolled over HIDDEN with SMEM
        scalar weights -- pure VALU work on full 128-lane vregs."""
        base = net * HIDDEN
        acc = jnp.maximum(prob * w1_ref[base] + b1_ref[base], 0.0) * w2_ref[base]
        for j in range(1, HIDDEN):
            idx = base + j
            acc = acc + jnp.maximum(prob * w1_ref[idx] + b1_ref[idx], 0.0) * w2_ref[idx]
        return acc + b2_ref[net]

    def stage(x0, x1, lamda, net):
        c = tau * correction(x1, net)                 # prob = x[:, 1]
        # 2-class softmax via sigmoid identity (1 exp + 1 EUP reciprocal).
        e = jnp.exp(x0 - x1)
        s1 = pl.reciprocal(1.0 + e, approx=True)
        s0 = 1.0 - s1
        sum_x = msum(x0 + x1)                         # torch.sum(x) over (N, 2)
        common = c - lamda - rho * (sum_x - sum_label)
        x0n = (common - lab0 * s0 * inv_n + alpha * x0) * inv_ta
        x1n = (common - lab1 * s1 * inv_n + alpha * x1) * inv_ta
        return x0n, x1n

    x0, x1 = stage(x0, x1, lamda, 0)
    lamda = lamda + rho * (msum(x1) - sum_label)
    x0, x1 = stage(x0, x1, lamda, 1)
    lamda = lamda + rho * (msum(x1) - sum_label)
    x0, x1 = stage(x0, x1, lamda, 2)

    # Lane-dense, full-width stores; (N, 2) layout is rebuilt in the wrapper.
    o0_ref[...] = x0
    o1_ref[...] = x1


def ivgd_forward(x, label, lamda, params, *, alpha, tau, rho):
    """x, label: (N, 1) float32 'probability of class 1' columns.
    params: (w1 (3,H), b1 (3,H), w2 (3,H), b2 (3,)) for the three correction nets.
    Returns the (N, 2) output matching torch's cat((1-x, x), dim=1) convention."""
    n = x.shape[0]
    rows = pl.cdiv(n, LANES)
    rows_pad = pl.cdiv(rows, SUBLANES) * SUBLANES
    total = rows_pad * LANES

    def to_slab(v):
        flat = jnp.reshape(v.astype(jnp.float32), (-1,))
        flat = jnp.pad(flat, (0, total - n))
        return jnp.reshape(flat, (rows_pad, LANES))

    x_slab = to_slab(x)
    lab_slab = to_slab(label)

    w1, b1, w2, b2 = params
    w1f = jnp.reshape(w1.astype(jnp.float32), (-1,))
    b1f = jnp.reshape(b1.astype(jnp.float32), (-1,))
    w2f = jnp.reshape(w2.astype(jnp.float32), (-1,))
    b2f = jnp.reshape(b2.astype(jnp.float32), (-1,))
    lamda_arr = jnp.asarray([lamda], dtype=jnp.float32)

    kernel = functools.partial(ivgd_kernel, alpha=alpha, tau=tau, rho=rho, n_true=n)

    slab_spec = pl.BlockSpec((rows_pad, LANES), lambda i: (0, 0))
    smem_spec = pl.BlockSpec(memory_space=pltpu.MemorySpace.SMEM)

    x0_out, x1_out = pl.pallas_call(
        kernel,
        out_shape=(jax.ShapeDtypeStruct((rows_pad, LANES), jnp.float32),
                   jax.ShapeDtypeStruct((rows_pad, LANES), jnp.float32)),
        grid=(1,),
        in_specs=[
            slab_spec,           # x slab
            slab_spec,           # label slab
            smem_spec,           # lamda scalar
            smem_spec,           # W1 flattened (3*H,)
            smem_spec,           # b1 flattened (3*H,)
            smem_spec,           # W2 flattened (3*H,)
            smem_spec,           # b2 (3,)
        ],
        out_specs=(slab_spec, slab_spec),
        compiler_params=pltpu.CompilerParams(
            dimension_semantics=("arbitrary",),
            vmem_limit_bytes=48 * 1024 * 1024,   # safe on v5e/v6e (128 MiB) and v7x (64 MiB)
        ),
    )(x_slab, lab_slab, lamda_arr, w1f, b1f, w2f, b2f)

    x0v = jnp.reshape(x0_out, (-1,))[:n]
    x1v = jnp.reshape(x1_out, (-1,))[:n]
    return jnp.stack([x0v, x1v], axis=1)


def ivgd_reference(x, label, lamda, params, *, alpha, tau, rho):
    """Pure-JAX transcription of the torch forward (correctness oracle)."""
    w1s, b1s, w2s, b2s = params
    n = x.shape[0]
    sum_label = jnp.sum(label)
    label2 = jnp.concatenate([1.0 - label, label], axis=1)
    x2 = jnp.concatenate([1.0 - x, x], axis=1)

    def net(prob, i):
        h = jnp.maximum(prob * w1s[i][None, :] + b1s[i][None, :], 0.0)
        return h @ w2s[i][:, None] + b2s[i]

    def stage(x2, lamda, i):
        prob = x2[:, 1:2]
        return (tau * net(prob, i)
                - label2 * jax.nn.softmax(x2, axis=1) / n
                - lamda - rho * (jnp.sum(x2) - sum_label)
                + alpha * x2) / (tau + alpha)

    x2 = stage(x2, lamda, 0)
    lamda = lamda + rho * (jnp.sum(x2[:, 1]) - sum_label)
    x2 = stage(x2, lamda, 1)
    lamda = lamda + rho * (jnp.sum(x2[:, 1]) - sum_label)
    x2 = stage(x2, lamda, 2)
    return x2


if __name__ == "__main__":
    N = 300                       # exercises padding (300 -> 8x128 slab)
    alpha, tau, rho = 1.0, 5.0, 1e-3
    lamda = 0.01

    key = jax.random.PRNGKey(0)
    kx, klab, kw1, kb1, kw2, kb2 = jax.random.split(key, 6)

    x = jax.random.uniform(kx, (N, 1), dtype=jnp.float32)                  # P(class 1)
    label = jax.random.bernoulli(klab, 0.3, (N, 1)).astype(jnp.float32)

    # Deterministic parameters for the three correction() MLPs (stacked over nets).
    w1 = 0.5 * jax.random.normal(kw1, (3, HIDDEN), dtype=jnp.float32)      # Linear(1,H).weight^T
    b1 = 0.1 * jax.random.normal(kb1, (3, HIDDEN), dtype=jnp.float32)      # Linear(1,H).bias
    w2 = 0.5 * jax.random.normal(kw2, (3, HIDDEN), dtype=jnp.float32)      # Linear(H,1).weight
    b2 = 0.1 * jax.random.normal(kb2, (3,), dtype=jnp.float32)             # Linear(H,1).bias
    params = (w1, b1, w2, b2)

    out = ivgd_forward(x, label, lamda, params, alpha=alpha, tau=tau, rho=rho)
    out = jax.block_until_ready(out)

    ref = ivgd_reference(x, label, lamda, params, alpha=alpha, tau=tau, rho=rho)
    ref = jax.block_until_ready(ref)

    np.testing.assert_allclose(np.asarray(out), np.asarray(ref), rtol=1e-4, atol=1e-4)
    print("KERNEL_OK")
</pallas_src>

<mosaic_0001>
module attributes {stable_mosaic.version = 11 : i64} {
  func.func @ivgd_kernel(%arg0: i32, %arg1: memref<8x128xf32, #tpu.memory_space<vmem>>, %arg2: memref<8x128xf32, #tpu.memory_space<vmem>>, %arg3: memref<1xf32, #tpu.memory_space<smem>>, %arg4: memref<48xf32, #tpu.memory_space<smem>>, %arg5: memref<48xf32, #tpu.memory_space<smem>>, %arg6: memref<48xf32, #tpu.memory_space<smem>>, %arg7: memref<3xf32, #tpu.memory_space<smem>>, %arg8: memref<8x128xf32, #tpu.memory_space<vmem>>, %arg9: memref<8x128xf32, #tpu.memory_space<vmem>>) attributes {dimension_semantics = [#tpu.dimension_semantics<arbitrary>], iteration_bounds = array<i64: 1>, scalar_prefetch = 0 : i64, scratch_operands = 0 : i64, tpu.core_type = #tpu.core_type<tc>, window_params = [{pipeline_mode = #tpu.pipeline_mode<synchronous>, transform_indices = @transform_0, window_bounds = array<i64: 8, 128>}, {pipeline_mode = #tpu.pipeline_mode<synchronous>, transform_indices = @transform_1, window_bounds = array<i64: 8, 128>}, {transform_indices = @transform_2, window_bounds = array<i64: 1>}, {transform_indices = @transform_3, window_bounds = array<i64: 48>}, {transform_indices = @transform_4, window_bounds = array<i64: 48>}, {transform_indices = @transform_5, window_bounds = array<i64: 48>}, {transform_indices = @transform_6, window_bounds = array<i64: 3>}, {pipeline_mode = #tpu.pipeline_mode<synchronous>, transform_indices = @transform_7, window_bounds = array<i64: 8, 128>}, {pipeline_mode = #tpu.pipeline_mode<synchronous>, transform_indices = @transform_8, window_bounds = array<i64: 8, 128>}]} {
    %c0 = arith.constant 0 : index
    %c0_0 = arith.constant 0 : index
    %0 = vector.load %arg1[%c0, %c0_0] : memref<8x128xf32, #tpu.memory_space<vmem>>, vector<8x128xf32>
    %c0_1 = arith.constant 0 : index
    %c0_2 = arith.constant 0 : index
    %1 = vector.load %arg2[%c0_1, %c0_2] : memref<8x128xf32, #tpu.memory_space<vmem>>, vector<8x128xf32>
    %c0_3 = arith.constant 0 : index
    %2 = memref.load %arg3[%c0_3] : memref<1xf32, #tpu.memory_space<smem>>
    %3 = tpu.iota {dimensions = array<i32: 0>} : vector<8x128xi32>
    %4 = tpu.iota {dimensions = array<i32: 1>} : vector<8x128xi32>
    %c128_i32 = arith.constant 128 : i32
    %5 = vector.broadcast %c128_i32 : i32 to vector<8x128xi32>
    %6 = arith.muli %3, %5 : vector<8x128xi32>
    %7 = arith.addi %6, %4 : vector<8x128xi32>
    %c300_i32 = arith.constant 300 : i32
    %8 = vector.broadcast %c300_i32 : i32 to vector<8x128xi32>
    %9 = arith.cmpi slt, %7, %8 : vector<8x128xi32>
    %10 = arith.extui %9 : vector<8x128xi1> to vector<8x128xi32>
    %11 = arith.sitofp %10 : vector<8x128xi32> to vector<8x128xf32>
    %12 = arith.mulf %1, %11 : vector<8x128xf32>
    %13 = vector.shape_cast %12 : vector<8x128xf32> to vector<1x8x128xf32>
    %cst = arith.constant dense<0.000000e+00> : vector<1xf32>
    %14 = vector.multi_reduction <add>, %13, %cst [1, 2] : vector<1x8x128xf32> to vector<1xf32>
    %15 = vector.shape_cast %14 : vector<1xf32> to vector<1x1x1xf32>
    %16 = vector.extract %15[0, 0, 0] : f32 from vector<1x1x1xf32>
    %cst_4 = arith.constant 1.000000e+00 : f32
    %17 = vector.broadcast %cst_4 : f32 to vector<8x128xf32>
    %18 = arith.subf %17, %1 : vector<8x128xf32>
    %cst_5 = arith.constant 1.000000e+00 : f32
    %19 = vector.broadcast %cst_5 : f32 to vector<8x128xf32>
    %20 = arith.subf %19, %0 : vector<8x128xf32>
    %c0_6 = arith.constant 0 : index
    %21 = memref.load %arg4[%c0_6] : memref<48xf32, #tpu.memory_space<smem>>
    %22 = vector.broadcast %21 : f32 to vector<8x128xf32>
    %23 = arith.mulf %0, %22 : vector<8x128xf32>
    %c0_7 = arith.constant 0 : index
    %24 = memref.load %arg5[%c0_7] : memref<48xf32, #tpu.memory_space<smem>>
    %25 = vector.broadcast %24 : f32 to vector<8x128xf32>
    %26 = arith.addf %23, %25 : vector<8x128xf32>
    %cst_8 = arith.constant 0.000000e+00 : f32
    %27 = vector.broadcast %cst_8 : f32 to vector<8x128xf32>
    %28 = arith.maximumf %26, %27 : vector<8x128xf32>
    %c0_9 = arith.constant 0 : index
    %29 = memref.load %arg6[%c0_9] : memref<48xf32, #tpu.memory_space<smem>>
    %30 = vector.broadcast %29 : f32 to vector<8x128xf32>
    %31 = arith.mulf %28, %30 : vector<8x128xf32>
    %c1 = arith.constant 1 : index
    %32 = memref.load %arg4[%c1] : memref<48xf32, #tpu.memory_space<smem>>
    %33 = vector.broadcast %32 : f32 to vector<8x128xf32>
    %34 = arith.mulf %0, %33 : vector<8x128xf32>
    %c1_10 = arith.constant 1 : index
    %35 = memref.load %arg5[%c1_10] : memref<48xf32, #tpu.memory_space<smem>>
    %36 = vector.broadcast %35 : f32 to vector<8x128xf32>
    %37 = arith.addf %34, %36 : vector<8x128xf32>
    %cst_11 = arith.constant 0.000000e+00 : f32
    %38 = vector.broadcast %cst_11 : f32 to vector<8x128xf32>
    %39 = arith.maximumf %37, %38 : vector<8x128xf32>
    %c1_12 = arith.constant 1 : index
    %40 = memref.load %arg6[%c1_12] : memref<48xf32, #tpu.memory_space<smem>>
    %41 = vector.broadcast %40 : f32 to vector<8x128xf32>
    %42 = arith.mulf %39, %41 : vector<8x128xf32>
    %43 = arith.addf %31, %42 : vector<8x128xf32>
    %c2 = arith.constant 2 : index
    %44 = memref.load %arg4[%c2] : memref<48xf32, #tpu.memory_space<smem>>
    %45 = vector.broadcast %44 : f32 to vector<8x128xf32>
    %46 = arith.mulf %0, %45 : vector<8x128xf32>
    %c2_13 = arith.constant 2 : index
    %47 = memref.load %arg5[%c2_13] : memref<48xf32, #tpu.memory_space<smem>>
    %48 = vector.broadcast %47 : f32 to vector<8x128xf32>
    %49 = arith.addf %46, %48 : vector<8x128xf32>
    %cst_14 = arith.constant 0.000000e+00 : f32
    %50 = vector.broadcast %cst_14 : f32 to vector<8x128xf32>
    %51 = arith.maximumf %49, %50 : vector<8x128xf32>
    %c2_15 = arith.constant 2 : index
    %52 = memref.load %arg6[%c2_15] : memref<48xf32, #tpu.memory_space<smem>>
    %53 = vector.broadcast %52 : f32 to vector<8x128xf32>
    %54 = arith.mulf %51, %53 : vector<8x128xf32>
    %55 = arith.addf %43, %54 : vector<8x128xf32>
    %c3 = arith.constant 3 : index
    %56 = memref.load %arg4[%c3] : memref<48xf32, #tpu.memory_space<smem>>
    %57 = vector.broadcast %56 : f32 to vector<8x128xf32>
    %58 = arith.mulf %0, %57 : vector<8x128xf32>
    %c3_16 = arith.constant 3 : index
    %59 = memref.load %arg5[%c3_16] : memref<48xf32, #tpu.memory_space<smem>>
    %60 = vector.broadcast %59 : f32 to vector<8x128xf32>
    %61 = arith.addf %58, %60 : vector<8x128xf32>
    %cst_17 = arith.constant 0.000000e+00 : f32
    %62 = vector.broadcast %cst_17 : f32 to vector<8x128xf32>
    %63 = arith.maximumf %61, %62 : vector<8x128xf32>
    %c3_18 = arith.constant 3 : index
    %64 = memref.load %arg6[%c3_18] : memref<48xf32, #tpu.memory_space<smem>>
    %65 = vector.broadcast %64 : f32 to vector<8x128xf32>
    %66 = arith.mulf %63, %65 : vector<8x128xf32>
    %67 = arith.addf %55, %66 : vector<8x128xf32>
    %c4 = arith.constant 4 : index
    %68 = memref.load %arg4[%c4] : memref<48xf32, #tpu.memory_space<smem>>
    %69 = vector.broadcast %68 : f32 to vector<8x128xf32>
    %70 = arith.mulf %0, %69 : vector<8x128xf32>
    %c4_19 = arith.constant 4 : index
    %71 = memref.load %arg5[%c4_19] : memref<48xf32, #tpu.memory_space<smem>>
    %72 = vector.broadcast %71 : f32 to vector<8x128xf32>
    %73 = arith.addf %70, %72 : vector<8x128xf32>
    %cst_20 = arith.constant 0.000000e+00 : f32
    %74 = vector.broadcast %cst_20 : f32 to vector<8x128xf32>
    %75 = arith.maximumf %73, %74 : vector<8x128xf32>
    %c4_21 = arith.constant 4 : index
    %76 = memref.load %arg6[%c4_21] : memref<48xf32, #tpu.memory_space<smem>>
    %77 = vector.broadcast %76 : f32 to vector<8x128xf32>
    %78 = arith.mulf %75, %77 : vector<8x128xf32>
    %79 = arith.addf %67, %78 : vector<8x128xf32>
    %c5 = arith.constant 5 : index
    %80 = memref.load %arg4[%c5] : memref<48xf32, #tpu.memory_space<smem>>
    %81 = vector.broadcast %80 : f32 to vector<8x128xf32>
    %82 = arith.mulf %0, %81 : vector<8x128xf32>
    %c5_22 = arith.constant 5 : index
    %83 = memref.load %arg5[%c5_22] : memref<48xf32, #tpu.memory_space<smem>>
    %84 = vector.broadcast %83 : f32 to vector<8x128xf32>
    %85 = arith.addf %82, %84 : vector<8x128xf32>
    %cst_23 = arith.constant 0.000000e+00 : f32
    %86 = vector.broadcast %cst_23 : f32 to vector<8x128xf32>
    %87 = arith.maximumf %85, %86 : vector<8x128xf32>
    %c5_24 = arith.constant 5 : index
    %88 = memref.load %arg6[%c5_24] : memref<48xf32, #tpu.memory_space<smem>>
    %89 = vector.broadcast %88 : f32 to vector<8x128xf32>
    %90 = arith.mulf %87, %89 : vector<8x128xf32>
    %91 = arith.addf %79, %90 : vector<8x128xf32>
    %c6 = arith.constant 6 : index
    %92 = memref.load %arg4[%c6] : memref<48xf32, #tpu.memory_space<smem>>
    %93 = vector.broadcast %92 : f32 to vector<8x128xf32>
    %94 = arith.mulf %0, %93 : vector<8x128xf32>
    %c6_25 = arith.constant 6 : index
    %95 = memref.load %arg5[%c6_25] : memref<48xf32, #tpu.memory_space<smem>>
    %96 = vector.broadcast %95 : f32 to vector<8x128xf32>
    %97 = arith.addf %94, %96 : vector<8x128xf32>
    %cst_26 = arith.constant 0.000000e+00 : f32
    %98 = vector.broadcast %cst_26 : f32 to vector<8x128xf32>
    %99 = arith.maximumf %97, %98 : vector<8x128xf32>
    %c6_27 = arith.constant 6 : index
    %100 = memref.load %arg6[%c6_27] : memref<48xf32, #tpu.memory_space<smem>>
    %101 = vector.broadcast %100 : f32 to vector<8x128xf32>
    %102 = arith.mulf %99, %101 : vector<8x128xf32>
    %103 = arith.addf %91, %102 : vector<8x128xf32>
    %c7 = arith.constant 7 : index
    %104 = memref.load %arg4[%c7] : memref<48xf32, #tpu.memory_space<smem>>
    %105 = vector.broadcast %104 : f32 to vector<8x128xf32>
    %106 = arith.mulf %0, %105 : vector<8x128xf32>
    %c7_28 = arith.constant 7 : index
    %107 = memref.load %arg5[%c7_28] : memref<48xf32, #tpu.memory_space<smem>>
    %108 = vector.broadcast %107 : f32 to vector<8x128xf32>
    %109 = arith.addf %106, %108 : vector<8x128xf32>
    %cst_29 = arith.constant 0.000000e+00 : f32
    %110 = vector.broadcast %cst_29 : f32 to vector<8x128xf32>
    %111 = arith.maximumf %109, %110 : vector<8x128xf32>
    %c7_30 = arith.constant 7 : index
    %112 = memref.load %arg6[%c7_30] : memref<48xf32, #tpu.memory_space<smem>>
    %113 = vector.broadcast %112 : f32 to vector<8x128xf32>
    %114 = arith.mulf %111, %113 : vector<8x128xf32>
    %115 = arith.addf %103, %114 : vector<8x128xf32>
    %c8 = arith.constant 8 : index
    %116 = memref.load %arg4[%c8] : memref<48xf32, #tpu.memory_space<smem>>
    %117 = vector.broadcast %116 : f32 to vector<8x128xf32>
    %118 = arith.mulf %0, %117 : vector<8x128xf32>
    %c8_31 = arith.constant 8 : index
    %119 = memref.load %arg5[%c8_31] : memref<48xf32, #tpu.memory_space<smem>>
    %120 = vector.broadcast %119 : f32 to vector<8x128xf32>
    %121 = arith.addf %118, %120 : vector<8x128xf32>
    %cst_32 = arith.constant 0.000000e+00 : f32
    %122 = vector.broadcast %cst_32 : f32 to vector<8x128xf32>
    %123 = arith.maximumf %121, %122 : vector<8x128xf32>
    %c8_33 = arith.constant 8 : index
    %124 = memref.load %arg6[%c8_33] : memref<48xf32, #tpu.memory_space<smem>>
    %125 = vector.broadcast %124 : f32 to vector<8x128xf32>
    %126 = arith.mulf %123, %125 : vector<8x128xf32>
    %127 = arith.addf %115, %126 : vector<8x128xf32>
    %c9 = arith.constant 9 : index
    %128 = memref.load %arg4[%c9] : memref<48xf32, #tpu.memory_space<smem>>
    %129 = vector.broadcast %128 : f32 to vector<8x128xf32>
    %130 = arith.mulf %0, %129 : vector<8x128xf32>
    %c9_34 = arith.constant 9 : index
    %131 = memref.load %arg5[%c9_34] : memref<48xf32, #tpu.memory_space<smem>>
    %132 = vector.broadcast %131 : f32 to vector<8x128xf32>
    %133 = arith.addf %130, %132 : vector<8x128xf32>
    %cst_35 = arith.constant 0.000000e+00 : f32
    %134 = vector.broadcast %cst_35 : f32 to vector<8x128xf32>
    %135 = arith.maximumf %133, %134 : vector<8x128xf32>
    %c9_36 = arith.constant 9 : index
    %136 = memref.load %arg6[%c9_36] : memref<48xf32, #tpu.memory_space<smem>>
    %137 = vector.broadcast %136 : f32 to vector<8x128xf32>
    %138 = arith.mulf %135, %137 : vector<8x128xf32>
    %139 = arith.addf %127, %138 : vector<8x128xf32>
    %c10 = arith.constant 10 : index
    %140 = memref.load %arg4[%c10] : memref<48xf32, #tpu.memory_space<smem>>
    %141 = vector.broadcast %140 : f32 to vector<8x128xf32>
    %142 = arith.mulf %0, %141 : vector<8x128xf32>
    %c10_37 = arith.constant 10 : index
    %143 = memref.load %arg5[%c10_37] : memref<48xf32, #tpu.memory_space<smem>>
    %144 = vector.broadcast %143 : f32 to vector<8x128xf32>
    %145 = arith.addf %142, %144 : vector<8x128xf32>
    %cst_38 = arith.constant 0.000000e+00 : f32
    %146 = vector.broadcast %cst_38 : f32 to vector<8x128xf32>
    %147 = arith.maximumf %145, %146 : vector<8x128xf32>
    %c10_39 = arith.constant 10 : index
    %148 = memref.load %arg6[%c10_39] : memref<48xf32, #tpu.memory_space<smem>>
    %149 = vector.broadcast %148 : f32 to vector<8x128xf32>
    %150 = arith.mulf %147, %149 : vector<8x128xf32>
    %151 = arith.addf %139, %150 : vector<8x128xf32>
    %c11 = arith.constant 11 : index
    %152 = memref.load %arg4[%c11] : memref<48xf32, #tpu.memory_space<smem>>
    %153 = vector.broadcast %152 : f32 to vector<8x128xf32>
    %154 = arith.mulf %0, %153 : vector<8x128xf32>
    %c11_40 = arith.constant 11 : index
    %155 = memref.load %arg5[%c11_40] : memref<48xf32, #tpu.memory_space<smem>>
    %156 = vector.broadcast %155 : f32 to vector<8x128xf32>
    %157 = arith.addf %154, %156 : vector<8x128xf32>
    %cst_41 = arith.constant 0.000000e+00 : f32
    %158 = vector.broadcast %cst_41 : f32 to vector<8x128xf32>
    %159 = arith.maximumf %157, %158 : vector<8x128xf32>
    %c11_42 = arith.constant 11 : index
    %160 = memref.load %arg6[%c11_42] : memref<48xf32, #tpu.memory_space<smem>>
    %161 = vector.broadcast %160 : f32 to vector<8x128xf32>
    %162 = arith.mulf %159, %161 : vector<8x128xf32>
    %163 = arith.addf %151, %162 : vector<8x128xf32>
    %c12 = arith.constant 12 : index
    %164 = memref.load %arg4[%c12] : memref<48xf32, #tpu.memory_space<smem>>
    %165 = vector.broadcast %164 : f32 to vector<8x128xf32>
    %166 = arith.mulf %0, %165 : vector<8x128xf32>
    %c12_43 = arith.constant 12 : index
    %167 = memref.load %arg5[%c12_43] : memref<48xf32, #tpu.memory_space<smem>>
    %168 = vector.broadcast %167 : f32 to vector<8x128xf32>
    %169 = arith.addf %166, %168 : vector<8x128xf32>
    %cst_44 = arith.constant 0.000000e+00 : f32
    %170 = vector.broadcast %cst_44 : f32 to vector<8x128xf32>
    %171 = arith.maximumf %169, %170 : vector<8x128xf32>
    %c12_45 = arith.constant 12 : index
    %172 = memref.load %arg6[%c12_45] : memref<48xf32, #tpu.memory_space<smem>>
    %173 = vector.broadcast %172 : f32 to vector<8x128xf32>
    %174 = arith.mulf %171, %173 : vector<8x128xf32>
    %175 = arith.addf %163, %174 : vector<8x128xf32>
    %c13 = arith.constant 13 : index
    %176 = memref.load %arg4[%c13] : memref<48xf32, #tpu.memory_space<smem>>
    %177 = vector.broadcast %176 : f32 to vector<8x128xf32>
    %178 = arith.mulf %0, %177 : vector<8x128xf32>
    %c13_46 = arith.constant 13 : index
    %179 = memref.load %arg5[%c13_46] : memref<48xf32, #tpu.memory_space<smem>>
    %180 = vector.broadcast %179 : f32 to vector<8x128xf32>
    %181 = arith.addf %178, %180 : vector<8x128xf32>
    %cst_47 = arith.constant 0.000000e+00 : f32
    %182 = vector.broadcast %cst_47 : f32 to vector<8x128xf32>
    %183 = arith.maximumf %181, %182 : vector<8x128xf32>
    %c13_48 = arith.constant 13 : index
    %184 = memref.load %arg6[%c13_48] : memref<48xf32, #tpu.memory_space<smem>>
    %185 = vector.broadcast %184 : f32 to vector<8x128xf32>
    %186 = arith.mulf %183, %185 : vector<8x128xf32>
    %187 = arith.addf %175, %186 : vector<8x128xf32>
    %c14 = arith.constant 14 : index
    %188 = memref.load %arg4[%c14] : memref<48xf32, #tpu.memory_space<smem>>
    %189 = vector.broadcast %188 : f32 to vector<8x128xf32>
    %190 = arith.mulf %0, %189 : vector<8x128xf32>
    %c14_49 = arith.constant 14 : index
    %191 = memref.load %arg5[%c14_49] : memref<48xf32, #tpu.memory_space<smem>>
    %192 = vector.broadcast %191 : f32 to vector<8x128xf32>
    %193 = arith.addf %190, %192 : vector<8x128xf32>
    %cst_50 = arith.constant 0.000000e+00 : f32
    %194 = vector.broadcast %cst_50 : f32 to vector<8x128xf32>
    %195 = arith.maximumf %193, %194 : vector<8x128xf32>
    %c14_51 = arith.constant 14 : index
    %196 = memref.load %arg6[%c14_51] : memref<48xf32, #tpu.memory_space<smem>>
    %197 = vector.broadcast %196 : f32 to vector<8x128xf32>
    %198 = arith.mulf %195, %197 : vector<8x128xf32>
    %199 = arith.addf %187, %198 : vector<8x128xf32>
    %c15 = arith.constant 15 : index
    %200 = memref.load %arg4[%c15] : memref<48xf32, #tpu.memory_space<smem>>
    %201 = vector.broadcast %200 : f32 to vector<8x128xf32>
    %202 = arith.mulf %0, %201 : vector<8x128xf32>
    %c15_52 = arith.constant 15 : index
    %203 = memref.load %arg5[%c15_52] : memref<48xf32, #tpu.memory_space<smem>>
    %204 = vector.broadcast %203 : f32 to vector<8x128xf32>
    %205 = arith.addf %202, %204 : vector<8x128xf32>
    %cst_53 = arith.constant 0.000000e+00 : f32
    %206 = vector.broadcast %cst_53 : f32 to vector<8x128xf32>
    %207 = arith.maximumf %205, %206 : vector<8x128xf32>
    %c15_54 = arith.constant 15 : index
    %208 = memref.load %arg6[%c15_54] : memref<48xf32, #tpu.memory_space<smem>>
    %209 = vector.broadcast %208 : f32 to vector<8x128xf32>
    %210 = arith.mulf %207, %209 : vector<8x128xf32>
    %211 = arith.addf %199, %210 : vector<8x128xf32>
    %c0_55 = arith.constant 0 : index
    %212 = memref.load %arg7[%c0_55] : memref<3xf32, #tpu.memory_space<smem>>
    %213 = vector.broadcast %212 : f32 to vector<8x128xf32>
    %214 = arith.addf %211, %213 : vector<8x128xf32>
    %cst_56 = arith.constant 5.000000e+00 : f32
    %215 = vector.broadcast %cst_56 : f32 to vector<8x128xf32>
    %216 = arith.mulf %215, %214 : vector<8x128xf32>
    %217 = arith.subf %20, %0 : vector<8x128xf32>
    %218 = math.exp %217 : vector<8x128xf32>
    %cst_57 = arith.constant 1.000000e+00 : f32
    %219 = vector.broadcast %cst_57 : f32 to vector<8x128xf32>
    %220 = arith.addf %219, %218 : vector<8x128xf32>
    %221 = tpu.reciprocal %220 {approx = true} : vector<8x128xf32> -> vector<8x128xf32>
    %cst_58 = arith.constant 1.000000e+00 : f32
    %222 = vector.broadcast %cst_58 : f32 to vector<8x128xf32>
    %223 = arith.subf %222, %221 : vector<8x128xf32>
    %224 = arith.addf %20, %0 : vector<8x128xf32>
    %225 = arith.mulf %224, %11 : vector<8x128xf32>
    %226 = vector.shape_cast %225 : vector<8x128xf32> to vector<1x8x128xf32>
    %cst_59 = arith.constant dense<0.000000e+00> : vector<1xf32>
    %227 = vector.multi_reduction <add>, %226, %cst_59 [1, 2] : vector<1x8x128xf32> to vector<1xf32>
    %228 = vector.shape_cast %227 : vector<1xf32> to vector<1x1x1xf32>
    %229 = vector.extract %228[0, 0, 0] : f32 from vector<1x1x1xf32>
    %230 = vector.broadcast %2 : f32 to vector<8x128xf32>
    %231 = arith.subf %216, %230 : vector<8x128xf32>
    %232 = arith.subf %229, %16 : f32
    %cst_60 = arith.constant 1.000000e-03 : f32
    %233 = arith.mulf %cst_60, %232 : f32
    %234 = vector.broadcast %233 : f32 to vector<8x128xf32>
    %235 = arith.subf %231, %234 : vector<8x128xf32>
    %236 = arith.mulf %18, %223 : vector<8x128xf32>
    %cst_61 = arith.constant 0.00333333341 : f32
    %237 = vector.broadcast %cst_61 : f32 to vector<8x128xf32>
    %238 = arith.mulf %236, %237 : vector<8x128xf32>
    %239 = arith.subf %235, %238 : vector<8x128xf32>
    %cst_62 = arith.constant 1.000000e+00 : f32
    %240 = vector.broadcast %cst_62 : f32 to vector<8x128xf32>
    %241 = arith.mulf %240, %20 : vector<8x128xf32>
    %242 = arith.addf %239, %241 : vector<8x128xf32>
    %cst_63 = arith.constant 0.166666672 : f32
    %243 = vector.broadcast %cst_63 : f32 to vector<8x128xf32>
    %244 = arith.mulf %242, %243 : vector<8x128xf32>
    %245 = arith.mulf %1, %221 : vector<8x128xf32>
    %cst_64 = arith.constant 0.00333333341 : f32
    %246 = vector.broadcast %cst_64 : f32 to vector<8x128xf32>
    %247 = arith.mulf %245, %246 : vector<8x128xf32>
    %248 = arith.subf %235, %247 : vector<8x128xf32>
    %cst_65 = arith.constant 1.000000e+00 : f32
    %249 = vector.broadcast %cst_65 : f32 to vector<8x128xf32>
    %250 = arith.mulf %249, %0 : vector<8x128xf32>
    %251 = arith.addf %248, %250 : vector<8x128xf32>
    %cst_66 = arith.constant 0.166666672 : f32
    %252 = vector.broadcast %cst_66 : f32 to vector<8x128xf32>
    %253 = arith.mulf %251, %252 : vector<8x128xf32>
    %254 = arith.mulf %253, %11 : vector<8x128xf32>
    %255 = vector.shape_cast %254 : vector<8x128xf32> to vector<1x8x128xf32>
    %cst_67 = arith.constant dense<0.000000e+00> : vector<1xf32>
    %256 = vector.multi_reduction <add>, %255, %cst_67 [1, 2] : vector<1x8x128xf32> to vector<1xf32>
    %257 = vector.shape_cast %256 : vector<1xf32> to vector<1x1x1xf32>
    %258 = vector.extract %257[0, 0, 0] : f32 from vector<1x1x1xf32>
    %259 = arith.subf %258, %16 : f32
    %cst_68 = arith.constant 1.000000e-03 : f32
    %260 = arith.mulf %cst_68, %259 : f32
    %261 = arith.addf %2, %260 : f32
    %c16 = arith.constant 16 : index
    %262 = memref.load %arg4[%c16] : memref<48xf32, #tpu.memory_space<smem>>
    %263 = vector.broadcast %262 : f32 to vector<8x128xf32>
    %264 = arith.mulf %253, %263 : vector<8x128xf32>
    %c16_69 = arith.constant 16 : index
    %265 = memref.load %arg5[%c16_69] : memref<48xf32, #tpu.memory_space<smem>>
    %266 = vector.broadcast %265 : f32 to vector<8x128xf32>
    %267 = arith.addf %264, %266 : vector<8x128xf32>
    %cst_70 = arith.constant 0.000000e+00 : f32
    %268 = vector.broadcast %cst_70 : f32 to vector<8x128xf32>
    %269 = arith.maximumf %267, %268 : vector<8x128xf32>
    %c16_71 = arith.constant 16 : index
    %270 = memref.load %arg6[%c16_71] : memref<48xf32, #tpu.memory_space<smem>>
    %271 = vector.broadcast %270 : f32 to vector<8x128xf32>
    %272 = arith.mulf %269, %271 : vector<8x128xf32>
    %c17 = arith.constant 17 : index
    %273 = memref.load %arg4[%c17] : memref<48xf32, #tpu.memory_space<smem>>
    %274 = vector.broadcast %273 : f32 to vector<8x128xf32>
    %275 = arith.mulf %253, %274 : vector<8x128xf32>
    %c17_72 = arith.constant 17 : index
    %276 = memref.load %arg5[%c17_72] : memref<48xf32, #tpu.memory_space<smem>>
    %277 = vector.broadcast %276 : f32 to vector<8x128xf32>
    %278 = arith.addf %275, %277 : vector<8x128xf32>
    %cst_73 = arith.constant 0.000000e+00 : f32
    %279 = vector.broadcast %cst_73 : f32 to vector<8x128xf32>
    %280 = arith.maximumf %278, %279 : vector<8x128xf32>
    %c17_74 = arith.constant 17 : index
    %281 = memref.load %arg6[%c17_74] : memref<48xf32, #tpu.memory_space<smem>>
    %282 = vector.broadcast %281 : f32 to vector<8x128xf32>
    %283 = arith.mulf %280, %282 : vector<8x128xf32>
    %284 = arith.addf %272, %283 : vector<8x128xf32>
    %c18 = arith.constant 18 : index
    %285 = memref.load %arg4[%c18] : memref<48xf32, #tpu.memory_space<smem>>
    %286 = vector.broadcast %285 : f32 to vector<8x128xf32>
    %287 = arith.mulf %253, %286 : vector<8x128xf32>
    %c18_75 = arith.constant 18 : index
    %288 = memref.load %arg5[%c18_75] : memref<48xf32, #tpu.memory_space<smem>>
    %289 = vector.broadcast %288 : f32 to vector<8x128xf32>
    %290 = arith.addf %287, %289 : vector<8x128xf32>
    %cst_76 = arith.constant 0.000000e+00 : f32
    %291 = vector.broadcast %cst_76 : f32 to vector<8x128xf32>
    %292 = arith.maximumf %290, %291 : vector<8x128xf32>
    %c18_77 = arith.constant 18 : index
    %293 = memref.load %arg6[%c18_77] : memref<48xf32, #tpu.memory_space<smem>>
    %294 = vector.broadcast %293 : f32 to vector<8x128xf32>
    %295 = arith.mulf %292, %294 : vector<8x128xf32>
    %296 = arith.addf %284, %295 : vector<8x128xf32>
    %c19 = arith.constant 19 : index
    %297 = memref.load %arg4[%c19] : memref<48xf32, #tpu.memory_space<smem>>
    %298 = vector.broadcast %297 : f32 to vector<8x128xf32>
    %299 = arith.mulf %253, %298 : vector<8x128xf32>
    %c19_78 = arith.constant 19 : index
    %300 = memref.load %arg5[%c19_78] : memref<48xf32, #tpu.memory_space<smem>>
    %301 = vector.broadcast %300 : f32 to vector<8x128xf32>
    %302 = arith.addf %299, %301 : vector<8x128xf32>
    %cst_79 = arith.constant 0.000000e+00 : f32
    %303 = vector.broadcast %cst_79 : f32 to vector<8x128xf32>
    %304 = arith.maximumf %302, %303 : vector<8x128xf32>
    %c19_80 = arith.constant 19 : index
    %305 = memref.load %arg6[%c19_80] : memref<48xf32, #tpu.memory_space<smem>>
    %306 = vector.broadcast %305 : f32 to vector<8x128xf32>
    %307 = arith.mulf %304, %306 : vector<8x128xf32>
    %308 = arith.addf %296, %307 : vector<8x128xf32>
    %c20 = arith.constant 20 : index
    %309 = memref.load %arg4[%c20] : memref<48xf32, #tpu.memory_space<smem>>
    %310 = vector.broadcast %309 : f32 to vector<8x128xf32>
    %311 = arith.mulf %253, %310 : vector<8x128xf32>
    %c20_81 = arith.constant 20 : index
    %312 = memref.load %arg5[%c20_81] : memref<48xf32, #tpu.memory_space<smem>>
    %313 = vector.broadcast %312 : f32 to vector<8x128xf32>
    %314 = arith.addf %311, %313 : vector<8x128xf32>
    %cst_82 = arith.constant 0.000000e+00 : f32
    %315 = vector.broadcast %cst_82 : f32 to vector<8x128xf32>
    %316 = arith.maximumf %314, %315 : vector<8x128xf32>
    %c20_83 = arith.constant 20 : index
    %317 = memref.load %arg6[%c20_83] : memref<48xf32, #tpu.memory_space<smem>>
    %318 = vector.broadcast %317 : f32 to vector<8x128xf32>
    %319 = arith.mulf %316, %318 : vector<8x128xf32>
    %320 = arith.addf %308, %319 : vector<8x128xf32>
    %c21 = arith.constant 21 : index
    %321 = memref.load %arg4[%c21] : memref<48xf32, #tpu.memory_space<smem>>
    %322 = vector.broadcast %321 : f32 to vector<8x128xf32>
    %323 = arith.mulf %253, %322 : vector<8x128xf32>
    %c21_84 = arith.constant 21 : index
    %324 = memref.load %arg5[%c21_84] : memref<48xf32, #tpu.memory_space<smem>>
    %325 = vector.broadcast %324 : f32 to vector<8x128xf32>
    %326 = arith.addf %323, %325 : vector<8x128xf32>
    %cst_85 = arith.constant 0.000000e+00 : f32
    %327 = vector.broadcast %cst_85 : f32 to vector<8x128xf32>
    %328 = arith.maximumf %326, %327 : vector<8x128xf32>
    %c21_86 = arith.constant 21 : index
    %329 = memref.load %arg6[%c21_86] : memref<48xf32, #tpu.memory_space<smem>>
    %330 = vector.broadcast %329 : f32 to vector<8x128xf32>
    %331 = arith.mulf %328, %330 : vector<8x128xf32>
    %332 = arith.addf %320, %331 : vector<8x128xf32>
    %c22 = arith.constant 22 : index
    %333 = memref.load %arg4[%c22] : memref<48xf32, #tpu.memory_space<smem>>
    %334 = vector.broadcast %333 : f32 to vector<8x128xf32>
    %335 = arith.mulf %253, %334 : vector<8x128xf32>
    %c22_87 = arith.constant 22 : index
    %336 = memref.load %arg5[%c22_87] : memref<48xf32, #tpu.memory_space<smem>>
    %337 = vector.broadcast %336 : f32 to vector<8x128xf32>
    %338 = arith.addf %335, %337 : vector<8x128xf32>
    %cst_88 = arith.constant 0.000000e+00 : f32
    %339 = vector.broadcast %cst_88 : f32 to vector<8x128xf32>
    %340 = arith.maximumf %338, %339 : vector<8x128xf32>
    %c22_89 = arith.constant 22 : index
    %341 = memref.load %arg6[%c22_89] : memref<48xf32, #tpu.memory_space<smem>>
    %342 = vector.broadcast %341 : f32 to vector<8x128xf32>
    %343 = arith.mulf %340, %342 : vector<8x128xf32>
    %344 = arith.addf %332, %343 : vector<8x128xf32>
    %c23 = arith.constant 23 : index
    %345 = memref.load %arg4[%c23] : memref<48xf32, #tpu.memory_space<smem>>
    %346 = vector.broadcast %345 : f32 to vector<8x128xf32>
    %347 = arith.mulf %253, %346 : vector<8x128xf32>
    %c23_90 = arith.constant 23 : index
    %348 = memref.load %arg5[%c23_90] : memref<48xf32, #tpu.memory_space<smem>>
    %349 = vector.broadcast %348 : f32 to vector<8x128xf32>
    %350 = arith.addf %347, %349 : vector<8x128xf32>
    %cst_91 = arith.constant 0.000000e+00 : f32
    %351 = vector.broadcast %cst_91 : f32 to vector<8x128xf32>
    %352 = arith.maximumf %350, %351 : vector<8x128xf32>
    %c23_92 = arith.constant 23 : index
    %353 = memref.load %arg6[%c23_92] : memref<48xf32, #tpu.memory_space<smem>>
    %354 = vector.broadcast %353 : f32 to vector<8x128xf32>
    %355 = arith.mulf %352, %354 : vector<8x128xf32>
    %356 = arith.addf %344, %355 : vector<8x128xf32>
    %c24 = arith.constant 24 : index
    %357 = memref.load %arg4[%c24] : memref<48xf32, #tpu.memory_space<smem>>
    %358 = vector.broadcast %357 : f32 to vector<8x128xf32>
    %359 = arith.mulf %253, %358 : vector<8x128xf32>
    %c24_93 = arith.constant 24 : index
    %360 = memref.load %arg5[%c24_93] : memref<48xf32, #tpu.memory_space<smem>>
    %361 = vector.broadcast %360 : f32 to vector<8x128xf32>
    %362 = arith.addf %359, %361 : vector<8x128xf32>
    %cst_94 = arith.constant 0.000000e+00 : f32
    %363 = vector.broadcast %cst_94 : f32 to vector<8x128xf32>
    %364 = arith.maximumf %362, %363 : vector<8x128xf32>
    %c24_95 = arith.constant 24 : index
    %365 = memref.load %arg6[%c24_95] : memref<48xf32, #tpu.memory_space<smem>>
    %366 = vector.broadcast %365 : f32 to vector<8x128xf32>
    %367 = arith.mulf %364, %366 : vector<8x128xf32>
    %368 = arith.addf %356, %367 : vector<8x128xf32>
    %c25 = arith.constant 25 : index
    %369 = memref.load %arg4[%c25] : memref<48xf32, #tpu.memory_space<smem>>
    %370 = vector.broadcast %369 : f32 to vector<8x128xf32>
    %371 = arith.mulf %253, %370 : vector<8x128xf32>
    %c25_96 = arith.constant 25 : index
    %372 = memref.load %arg5[%c25_96] : memref<48xf32, #tpu.memory_space<smem>>
    %373 = vector.broadcast %372 : f32 to vector<8x128xf32>
    %374 = arith.addf %371, %373 : vector<8x128xf32>
    %cst_97 = arith.constant 0.000000e+00 : f32
    %375 = vector.broadcast %cst_97 : f32 to vector<8x128xf32>
    %376 = arith.maximumf %374, %375 : vector<8x128xf32>
    %c25_98 = arith.constant 25 : index
    %377 = memref.load %arg6[%c25_98] : memref<48xf32, #tpu.memory_space<smem>>
    %378 = vector.broadcast %377 : f32 to vector<8x128xf32>
    %379 = arith.mulf %376, %378 : vector<8x128xf32>
    %380 = arith.addf %368, %379 : vector<8x128xf32>
    %c26 = arith.constant 26 : index
    %381 = memref.load %arg4[%c26] : memref<48xf32, #tpu.memory_space<smem>>
    %382 = vector.broadcast %381 : f32 to vector<8x128xf32>
    %383 = arith.mulf %253, %382 : vector<8x128xf32>
    %c26_99 = arith.constant 26 : index
    %384 = memref.load %arg5[%c26_99] : memref<48xf32, #tpu.memory_space<smem>>
    %385 = vector.broadcast %384 : f32 to vector<8x128xf32>
    %386 = arith.addf %383, %385 : vector<8x128xf32>
    %cst_100 = arith.constant 0.000000e+00 : f32
    %387 = vector.broadcast %cst_100 : f32 to vector<8x128xf32>
    %388 = arith.maximumf %386, %387 : vector<8x128xf32>
    %c26_101 = arith.constant 26 : index
    %389 = memref.load %arg6[%c26_101] : memref<48xf32, #tpu.memory_space<smem>>
    %390 = vector.broadcast %389 : f32 to vector<8x128xf32>
    %391 = arith.mulf %388, %390 : vector<8x128xf32>
    %392 = arith.addf %380, %391 : vector<8x128xf32>
    %c27 = arith.constant 27 : index
    %393 = memref.load %arg4[%c27] : memref<48xf32, #tpu.memory_space<smem>>
    %394 = vector.broadcast %393 : f32 to vector<8x128xf32>
    %395 = arith.mulf %253, %394 : vector<8x128xf32>
    %c27_102 = arith.constant 27 : index
    %396 = memref.load %arg5[%c27_102] : memref<48xf32, #tpu.memory_space<smem>>
    %397 = vector.broadcast %396 : f32 to vector<8x128xf32>
    %398 = arith.addf %395, %397 : vector<8x128xf32>
    %cst_103 = arith.constant 0.000000e+00 : f32
    %399 = vector.broadcast %cst_103 : f32 to vector<8x128xf32>
    %400 = arith.maximumf %398, %399 : vector<8x128xf32>
    %c27_104 = arith.constant 27 : index
    %401 = memref.load %arg6[%c27_104] : memref<48xf32, #tpu.memory_space<smem>>
    %402 = vector.broadcast %401 : f32 to vector<8x128xf32>
    %403 = arith.mulf %400, %402 : vector<8x128xf32>
    %404 = arith.addf %392, %403 : vector<8x128xf32>
    %c28 = arith.constant 28 : index
    %405 = memref.load %arg4[%c28] : memref<48xf32, #tpu.memory_space<smem>>
    %406 = vector.broadcast %405 : f32 to vector<8x128xf32>
    %407 = arith.mulf %253, %406 : vector<8x128xf32>
    %c28_105 = arith.constant 28 : index
    %408 = memref.load %arg5[%c28_105] : memref<48xf32, #tpu.memory_space<smem>>
    %409 = vector.broadcast %408 : f32 to vector<8x128xf32>
    %410 = arith.addf %407, %409 : vector<8x128xf32>
    %cst_106 = arith.constant 0.000000e+00 : f32
    %411 = vector.broadcast %cst_106 : f32 to vector<8x128xf32>
    %412 = arith.maximumf %410, %411 : vector<8x128xf32>
    %c28_107 = arith.constant 28 : index
    %413 = memref.load %arg6[%c28_107] : memref<48xf32, #tpu.memory_space<smem>>
    %414 = vector.broadcast %413 : f32 to vector<8x128xf32>
    %415 = arith.mulf %412, %414 : vector<8x128xf32>
    %416 = arith.addf %404, %415 : vector<8x128xf32>
    %c29 = arith.constant 29 : index
    %417 = memref.load %arg4[%c29] : memref<48xf32, #tpu.memory_space<smem>>
    %418 = vector.broadcast %417 : f32 to vector<8x128xf32>
    %419 = arith.mulf %253, %418 : vector<8x128xf32>
    %c29_108 = arith.constant 29 : index
    %420 = memref.load %arg5[%c29_108] : memref<48xf32, #tpu.memory_space<smem>>
    %421 = vector.broadcast %420 : f32 to vector<8x128xf32>
    %422 = arith.addf %419, %421 : vector<8x128xf32>
    %cst_109 = arith.constant 0.000000e+00 : f32
    %423 = vector.broadcast %cst_109 : f32 to vector<8x128xf32>
    %424 = arith.maximumf %422, %423 : vector<8x128xf32>
    %c29_110 = arith.constant 29 : index
    %425 = memref.load %arg6[%c29_110] : memref<48xf32, #tpu.memory_space<smem>>
    %426 = vector.broadcast %425 : f32 to vector<8x128xf32>
    %427 = arith.mulf %424, %426 : vector<8x128xf32>
    %428 = arith.addf %416, %427 : vector<8x128xf32>
    %c30 = arith.constant 30 : index
    %429 = memref.load %arg4[%c30] : memref<48xf32, #tpu.memory_space<smem>>
    %430 = vector.broadcast %429 : f32 to vector<8x128xf32>
    %431 = arith.mulf %253, %430 : vector<8x128xf32>
    %c30_111 = arith.constant 30 : index
    %432 = memref.load %arg5[%c30_111] : memref<48xf32, #tpu.memory_space<smem>>
    %433 = vector.broadcast %432 : f32 to vector<8x128xf32>
    %434 = arith.addf %431, %433 : vector<8x128xf32>
    %cst_112 = arith.constant 0.000000e+00 : f32
    %435 = vector.broadcast %cst_112 : f32 to vector<8x128xf32>
    %436 = arith.maximumf %434, %435 : vector<8x128xf32>
    %c30_113 = arith.constant 30 : index
    %437 = memref.load %arg6[%c30_113] : memref<48xf32, #tpu.memory_space<smem>>
    %438 = vector.broadcast %437 : f32 to vector<8x128xf32>
    %439 = arith.mulf %436, %438 : vector<8x128xf32>
    %440 = arith.addf %428, %439 : vector<8x128xf32>
    %c31 = arith.constant 31 : index
    %441 = memref.load %arg4[%c31] : memref<48xf32, #tpu.memory_space<smem>>
    %442 = vector.broadcast %441 : f32 to vector<8x128xf32>
    %443 = arith.mulf %253, %442 : vector<8x128xf32>
    %c31_114 = arith.constant 31 : index
    %444 = memref.load %arg5[%c31_114] : memref<48xf32, #tpu.memory_space<smem>>
    %445 = vector.broadcast %444 : f32 to vector<8x128xf32>
    %446 = arith.addf %443, %445 : vector<8x128xf32>
    %cst_115 = arith.constant 0.000000e+00 : f32
    %447 = vector.broadcast %cst_115 : f32 to vector<8x128xf32>
    %448 = arith.maximumf %446, %447 : vector<8x128xf32>
    %c31_116 = arith.constant 31 : index
    %449 = memref.load %arg6[%c31_116] : memref<48xf32, #tpu.memory_space<smem>>
    %450 = vector.broadcast %449 : f32 to vector<8x128xf32>
    %451 = arith.mulf %448, %450 : vector<8x128xf32>
    %452 = arith.addf %440, %451 : vector<8x128xf32>
    %c1_117 = arith.constant 1 : index
    %453 = memref.load %arg7[%c1_117] : memref<3xf32, #tpu.memory_space<smem>>
    %454 = vector.broadcast %453 : f32 to vector<8x128xf32>
    %455 = arith.addf %452, %454 : vector<8x128xf32>
    %cst_118 = arith.constant 5.000000e+00 : f32
    %456 = vector.broadcast %cst_118 : f32 to vector<8x128xf32>
    %457 = arith.mulf %456, %455 : vector<8x128xf32>
    %458 = arith.subf %244, %253 : vector<8x128xf32>
    %459 = math.exp %458 : vector<8x128xf32>
    %cst_119 = arith.constant 1.000000e+00 : f32
    %460 = vector.broadcast %cst_119 : f32 to vector<8x128xf32>
    %461 = arith.addf %460, %459 : vector<8x128xf32>
    %462 = tpu.reciprocal %461 {approx = true} : vector<8x128xf32> -> vector<8x128xf32>
    %cst_120 = arith.constant 1.000000e+00 : f32
    %463 = vector.broadcast %cst_120 : f32 to vector<8x128xf32>
    %464 = arith.subf %463, %462 : vector<8x128xf32>
    %465 = arith.addf %244, %253 : vector<8x128xf32>
    %466 = arith.mulf %465, %11 : vector<8x128xf32>
    %467 = vector.shape_cast %466 : vector<8x128xf32> to vector<1x8x128xf32>
    %cst_121 = arith.constant dense<0.000000e+00> : vector<1xf32>
    %468 = vector.multi_reduction <add>, %467, %cst_121 [1, 2] : vector<1x8x128xf32> to vector<1xf32>
    %469 = vector.shape_cast %468 : vector<1xf32> to vector<1x1x1xf32>
    %470 = vector.extract %469[0, 0, 0] : f32 from vector<1x1x1xf32>
    %471 = vector.broadcast %261 : f32 to vector<8x128xf32>
    %472 = arith.subf %457, %471 : vector<8x128xf32>
    %473 = arith.subf %470, %16 : f32
    %cst_122 = arith.constant 1.000000e-03 : f32
    %474 = arith.mulf %cst_122, %473 : f32
    %475 = vector.broadcast %474 : f32 to vector<8x128xf32>
    %476 = arith.subf %472, %475 : vector<8x128xf32>
    %477 = arith.mulf %18, %464 : vector<8x128xf32>
    %cst_123 = arith.constant 0.00333333341 : f32
    %478 = vector.broadcast %cst_123 : f32 to vector<8x128xf32>
    %479 = arith.mulf %477, %478 : vector<8x128xf32>
    %480 = arith.subf %476, %479 : vector<8x128xf32>
    %cst_124 = arith.constant 1.000000e+00 : f32
    %481 = vector.broadcast %cst_124 : f32 to vector<8x128xf32>
    %482 = arith.mulf %481, %244 : vector<8x128xf32>
    %483 = arith.addf %480, %482 : vector<8x128xf32>
    %cst_125 = arith.constant 0.166666672 : f32
    %484 = vector.broadcast %cst_125 : f32 to vector<8x128xf32>
    %485 = arith.mulf %483, %484 : vector<8x128xf32>
    %486 = arith.mulf %1, %462 : vector<8x128xf32>
    %cst_126 = arith.constant 0.00333333341 : f32
    %487 = vector.broadcast %cst_126 : f32 to vector<8x128xf32>
    %488 = arith.mulf %486, %487 : vector<8x128xf32>
    %489 = arith.subf %476, %488 : vector<8x128xf32>
    %cst_127 = arith.constant 1.000000e+00 : f32
    %490 = vector.broadcast %cst_127 : f32 to vector<8x128xf32>
    %491 = arith.mulf %490, %253 : vector<8x128xf32>
    %492 = arith.addf %489, %491 : vector<8x128xf32>
    %cst_128 = arith.constant 0.166666672 : f32
    %493 = vector.broadcast %cst_128 : f32 to vector<8x128xf32>
    %494 = arith.mulf %492, %493 : vector<8x128xf32>
    %495 = arith.mulf %494, %11 : vector<8x128xf32>
    %496 = vector.shape_cast %495 : vector<8x128xf32> to vector<1x8x128xf32>
    %cst_129 = arith.constant dense<0.000000e+00> : vector<1xf32>
    %497 = vector.multi_reduction <add>, %496, %cst_129 [1, 2] : vector<1x8x128xf32> to vector<1xf32>
    %498 = vector.shape_cast %497 : vector<1xf32> to vector<1x1x1xf32>
    %499 = vector.extract %498[0, 0, 0] : f32 from vector<1x1x1xf32>
    %500 = arith.subf %499, %16 : f32
    %cst_130 = arith.constant 1.000000e-03 : f32
    %501 = arith.mulf %cst_130, %500 : f32
    %502 = arith.addf %261, %501 : f32
    %c32 = arith.constant 32 : index
    %503 = memref.load %arg4[%c32] : memref<48xf32, #tpu.memory_space<smem>>
    %504 = vector.broadcast %503 : f32 to vector<8x128xf32>
    %505 = arith.mulf %494, %504 : vector<8x128xf32>
    %c32_131 = arith.constant 32 : index
    %506 = memref.load %arg5[%c32_131] : memref<48xf32, #tpu.memory_space<smem>>
    %507 = vector.broadcast %506 : f32 to vector<8x128xf32>
    %508 = arith.addf %505, %507 : vector<8x128xf32>
    %cst_132 = arith.constant 0.000000e+00 : f32
    %509 = vector.broadcast %cst_132 : f32 to vector<8x128xf32>
    %510 = arith.maximumf %508, %509 : vector<8x128xf32>
    %c32_133 = arith.constant 32 : index
    %511 = memref.load %arg6[%c32_133] : memref<48xf32, #tpu.memory_space<smem>>
    %512 = vector.broadcast %511 : f32 to vector<8x128xf32>
    %513 = arith.mulf %510, %512 : vector<8x128xf32>
    %c33 = arith.constant 33 : index
    %514 = memref.load %arg4[%c33] : memref<48xf32, #tpu.memory_space<smem>>
    %515 = vector.broadcast %514 : f32 to vector<8x128xf32>
    %516 = arith.mulf %494, %515 : vector<8x128xf32>
    %c33_134 = arith.constant 33 : index
    %517 = memref.load %arg5[%c33_134] : memref<48xf32, #tpu.memory_space<smem>>
    %518 = vector.broadcast %517 : f32 to vector<8x128xf32>
    %519 = arith.addf %516, %518 : vector<8x128xf32>
    %cst_135 = arith.constant 0.000000e+00 : f32
    %520 = vector.broadcast %cst_135 : f32 to vector<8x128xf32>
    %521 = arith.maximumf %519, %520 : vector<8x128xf32>
    %c33_136 = arith.constant 33 : index
    %522 = memref.load %arg6[%c33_136] : memref<48xf32, #tpu.memory_space<smem>>
    %523 = vector.broadcast %522 : f32 to vector<8x128xf32>
    %524 = arith.mulf %521, %523 : vector<8x128xf32>
    %525 = arith.addf %513, %524 : vector<8x128xf32>
    %c34 = arith.constant 34 : index
    %526 = memref.load %arg4[%c34] : memref<48xf32, #tpu.memory_space<smem>>
    %527 = vector.broadcast %526 : f32 to vector<8x128xf32>
    %528 = arith.mulf %494, %527 : vector<8x128xf32>
    %c34_137 = arith.constant 34 : index
    %529 = memref.load %arg5[%c34_137] : memref<48xf32, #tpu.memory_space<smem>>
    %530 = vector.broadcast %529 : f32 to vector<8x128xf32>
    %531 = arith.addf %528, %530 : vector<8x128xf32>
    %cst_138 = arith.constant 0.000000e+00 : f32
    %532 = vector.broadcast %cst_138 : f32 to vector<8x128xf32>
    %533 = arith.maximumf %531, %532 : vector<8x128xf32>
    %c34_139 = arith.constant 34 : index
    %534 = memref.load %arg6[%c34_139] : memref<48xf32, #tpu.memory_space<smem>>
    %535 = vector.broadcast %534 : f32 to vector<8x128xf32>
    %536 = arith.mulf %533, %535 : vector<8x128xf32>
    %537 = arith.addf %525, %536 : vector<8x128xf32>
    %c35 = arith.constant 35 : index
    %538 = memref.load %arg4[%c35] : memref<48xf32, #tpu.memory_space<smem>>
    %539 = vector.broadcast %538 : f32 to vector<8x128xf32>
    %540 = arith.mulf %494, %539 : vector<8x128xf32>
    %c35_140 = arith.constant 35 : index
    %541 = memref.load %arg5[%c35_140] : memref<48xf32, #tpu.memory_space<smem>>
    %542 = vector.broadcast %541 : f32 to vector<8x128xf32>
    %543 = arith.addf %540, %542 : vector<8x128xf32>
    %cst_141 = arith.constant 0.000000e+00 : f32
    %544 = vector.broadcast %cst_141 : f32 to vector<8x128xf32>
    %545 = arith.maximumf %543, %544 : vector<8x128xf32>
    %c35_142 = arith.constant 35 : index
    %546 = memref.load %arg6[%c35_142] : memref<48xf32, #tpu.memory_space<smem>>
    %547 = vector.broadcast %546 : f32 to vector<8x128xf32>
    %548 = arith.mulf %545, %547 : vector<8x128xf32>
    %549 = arith.addf %537, %548 : vector<8x128xf32>
    %c36 = arith.constant 36 : index
    %550 = memref.load %arg4[%c36] : memref<48xf32, #tpu.memory_space<smem>>
    %551 = vector.broadcast %550 : f32 to vector<8x128xf32>
    %552 = arith.mulf %494, %551 : vector<8x128xf32>
    %c36_143 = arith.constant 36 : index
    %553 = memref.load %arg5[%c36_143] : memref<48xf32, #tpu.memory_space<smem>>
    %554 = vector.broadcast %553 : f32 to vector<8x128xf32>
    %555 = arith.addf %552, %554 : vector<8x128xf32>
    %cst_144 = arith.constant 0.000000e+00 : f32
    %556 = vector.broadcast %cst_144 : f32 to vector<8x128xf32>
    %557 = arith.maximumf %555, %556 : vector<8x128xf32>
    %c36_145 = arith.constant 36 : index
    %558 = memref.load %arg6[%c36_145] : memref<48xf32, #tpu.memory_space<smem>>
    %559 = vector.broadcast %558 : f32 to vector<8x128xf32>
    %560 = arith.mulf %557, %559 : vector<8x128xf32>
    %561 = arith.addf %549, %560 : vector<8x128xf32>
    %c37 = arith.constant 37 : index
    %562 = memref.load %arg4[%c37] : memref<48xf32, #tpu.memory_space<smem>>
    %563 = vector.broadcast %562 : f32 to vector<8x128xf32>
    %564 = arith.mulf %494, %563 : vector<8x128xf32>
    %c37_146 = arith.constant 37 : index
    %565 = memref.load %arg5[%c37_146] : memref<48xf32, #tpu.memory_space<smem>>
    %566 = vector.broadcast %565 : f32 to vector<8x128xf32>
    %567 = arith.addf %564, %566 : vector<8x128xf32>
    %cst_147 = arith.constant 0.000000e+00 : f32
    %568 = vector.broadcast %cst_147 : f32 to vector<8x128xf32>
    %569 = arith.maximumf %567, %568 : vector<8x128xf32>
    %c37_148 = arith.constant 37 : index
    %570 = memref.load %arg6[%c37_148] : memref<48xf32, #tpu.memory_space<smem>>
    %571 = vector.broadcast %570 : f32 to vector<8x128xf32>
    %572 = arith.mulf %569, %571 : vector<8x128xf32>
    %573 = arith.addf %561, %572 : vector<8x128xf32>
    %c38 = arith.constant 38 : index
    %574 = memref.load %arg4[%c38] : memref<48xf32, #tpu.memory_space<smem>>
    %575 = vector.broadcast %574 : f32 to vector<8x128xf32>
    %576 = arith.mulf %494, %575 : vector<8x128xf32>
    %c38_149 = arith.constant 38 : index
    %577 = memref.load %arg5[%c38_149] : memref<48xf32, #tpu.memory_space<smem>>
    %578 = vector.broadcast %577 : f32 to vector<8x128xf32>
    %579 = arith.addf %576, %578 : vector<8x128xf32>
    %cst_150 = arith.constant 0.000000e+00 : f32
    %580 = vector.broadcast %cst_150 : f32 to vector<8x128xf32>
    %581 = arith.maximumf %579, %580 : vector<8x128xf32>
    %c38_151 = arith.constant 38 : index
    %582 = memref.load %arg6[%c38_151] : memref<48xf32, #tpu.memory_space<smem>>
    %583 = vector.broadcast %582 : f32 to vector<8x128xf32>
    %584 = arith.mulf %581, %583 : vector<8x128xf32>
    %585 = arith.addf %573, %584 : vector<8x128xf32>
    %c39 = arith.constant 39 : index
    %586 = memref.load %arg4[%c39] : memref<48xf32, #tpu.memory_space<smem>>
    %587 = vector.broadcast %586 : f32 to vector<8x128xf32>
    %588 = arith.mulf %494, %587 : vector<8x128xf32>
    %c39_152 = arith.constant 39 : index
    %589 = memref.load %arg5[%c39_152] : memref<48xf32, #tpu.memory_space<smem>>
    %590 = vector.broadcast %589 : f32 to vector<8x128xf32>
    %591 = arith.addf %588, %590 : vector<8x128xf32>
    %cst_153 = arith.constant 0.000000e+00 : f32
    %592 = vector.broadcast %cst_153 : f32 to vector<8x128xf32>
    %593 = arith.maximumf %591, %592 : vector<8x128xf32>
    %c39_154 = arith.constant 39 : index
    %594 = memref.load %arg6[%c39_154] : memref<48xf32, #tpu.memory_space<smem>>
    %595 = vector.broadcast %594 : f32 to vector<8x128xf32>
    %596 = arith.mulf %593, %595 : vector<8x128xf32>
    %597 = arith.addf %585, %596 : vector<8x128xf32>
    %c40 = arith.constant 40 : index
    %598 = memref.load %arg4[%c40] : memref<48xf32, #tpu.memory_space<smem>>
    %599 = vector.broadcast %598 : f32 to vector<8x128xf32>
    %600 = arith.mulf %494, %599 : vector<8x128xf32>
    %c40_155 = arith.constant 40 : index
    %601 = memref.load %arg5[%c40_155] : memref<48xf32, #tpu.memory_space<smem>>
    %602 = vector.broadcast %601 : f32 to vector<8x128xf32>
    %603 = arith.addf %600, %602 : vector<8x128xf32>
    %cst_156 = arith.constant 0.000000e+00 : f32
    %604 = vector.broadcast %cst_156 : f32 to vector<8x128xf32>
    %605 = arith.maximumf %603, %604 : vector<8x128xf32>
    %c40_157 = arith.constant 40 : index
    %606 = memref.load %arg6[%c40_157] : memref<48xf32, #tpu.memory_space<smem>>
    %607 = vector.broadcast %606 : f32 to vector<8x128xf32>
    %608 = arith.mulf %605, %607 : vector<8x128xf32>
    %609 = arith.addf %597, %608 : vector<8x128xf32>
    %c41 = arith.constant 41 : index
    %610 = memref.load %arg4[%c41] : memref<48xf32, #tpu.memory_space<smem>>
    %611 = vector.broadcast %610 : f32 to vector<8x128xf32>
    %612 = arith.mulf %494, %611 : vector<8x128xf32>
    %c41_158 = arith.constant 41 : index
    %613 = memref.load %arg5[%c41_158] : memref<48xf32, #tpu.memory_space<smem>>
    %614 = vector.broadcast %613 : f32 to vector<8x128xf32>
    %615 = arith.addf %612, %614 : vector<8x128xf32>
    %cst_159 = arith.constant 0.000000e+00 : f32
    %616 = vector.broadcast %cst_159 : f32 to vector<8x128xf32>
    %617 = arith.maximumf %615, %616 : vector<8x128xf32>
    %c41_160 = arith.constant 41 : index
    %618 = memref.load %arg6[%c41_160] : memref<48xf32, #tpu.memory_space<smem>>
    %619 = vector.broadcast %618 : f32 to vector<8x128xf32>
    %620 = arith.mulf %617, %619 : vector<8x128xf32>
    %621 = arith.addf %609, %620 : vector<8x128xf32>
    %c42 = arith.constant 42 : index
    %622 = memref.load %arg4[%c42] : memref<48xf32, #tpu.memory_space<smem>>
    %623 = vector.broadcast %622 : f32 to vector<8x128xf32>
    %624 = arith.mulf %494, %623 : vector<8x128xf32>
    %c42_161 = arith.constant 42 : index
    %625 = memref.load %arg5[%c42_161] : memref<48xf32, #tpu.memory_space<smem>>
    %626 = vector.broadcast %625 : f32 to vector<8x128xf32>
    %627 = arith.addf %624, %626 : vector<8x128xf32>
    %cst_162 = arith.constant 0.000000e+00 : f32
    %628 = vector.broadcast %cst_162 : f32 to vector<8x128xf32>
    %629 = arith.maximumf %627, %628 : vector<8x128xf32>
    %c42_163 = arith.constant 42 : index
    %630 = memref.load %arg6[%c42_163] : memref<48xf32, #tpu.memory_space<smem>>
    %631 = vector.broadcast %630 : f32 to vector<8x128xf32>
    %632 = arith.mulf %629, %631 : vector<8x128xf32>
    %633 = arith.addf %621, %632 : vector<8x128xf32>
    %c43 = arith.constant 43 : index
    %634 = memref.load %arg4[%c43] : memref<48xf32, #tpu.memory_space<smem>>
    %635 = vector.broadcast %634 : f32 to vector<8x128xf32>
    %636 = arith.mulf %494, %635 : vector<8x128xf32>
    %c43_164 = arith.constant 43 : index
    %637 = memref.load %arg5[%c43_164] : memref<48xf32, #tpu.memory_space<smem>>
    %638 = vector.broadcast %637 : f32 to vector<8x128xf32>
    %639 = arith.addf %636, %638 : vector<8x128xf32>
    %cst_165 = arith.constant 0.000000e+00 : f32
    %640 = vector.broadcast %cst_165 : f32 to vector<8x128xf32>
    %641 = arith.maximumf %639, %640 : vector<8x128xf32>
    %c43_166 = arith.constant 43 : index
    %642 = memref.load %arg6[%c43_166] : memref<48xf32, #tpu.memory_space<smem>>
    %643 = vector.broadcast %642 : f32 to vector<8x128xf32>
    %644 = arith.mulf %641, %643 : vector<8x128xf32>
    %645 = arith.addf %633, %644 : vector<8x128xf32>
    %c44 = arith.constant 44 : index
    %646 = memref.load %arg4[%c44] : memref<48xf32, #tpu.memory_space<smem>>
    %647 = vector.broadcast %646 : f32 to vector<8x128xf32>
    %648 = arith.mulf %494, %647 : vector<8x128xf32>
    %c44_167 = arith.constant 44 : index
    %649 = memref.load %arg5[%c44_167] : memref<48xf32, #tpu.memory_space<smem>>
    %650 = vector.broadcast %649 : f32 to vector<8x128xf32>
    %651 = arith.addf %648, %650 : vector<8x128xf32>
    %cst_168 = arith.constant 0.000000e+00 : f32
    %652 = vector.broadcast %cst_168 : f32 to vector<8x128xf32>
    %653 = arith.maximumf %651, %652 : vector<8x128xf32>
    %c44_169 = arith.constant 44 : index
    %654 = memref.load %arg6[%c44_169] : memref<48xf32, #tpu.memory_space<smem>>
    %655 = vector.broadcast %654 : f32 to vector<8x128xf32>
    %656 = arith.mulf %653, %655 : vector<8x128xf32>
    %657 = arith.addf %645, %656 : vector<8x128xf32>
    %c45 = arith.constant 45 : index
    %658 = memref.load %arg4[%c45] : memref<48xf32, #tpu.memory_space<smem>>
    %659 = vector.broadcast %658 : f32 to vector<8x128xf32>
    %660 = arith.mulf %494, %659 : vector<8x128xf32>
    %c45_170 = arith.constant 45 : index
    %661 = memref.load %arg5[%c45_170] : memref<48xf32, #tpu.memory_space<smem>>
    %662 = vector.broadcast %661 : f32 to vector<8x128xf32>
    %663 = arith.addf %660, %662 : vector<8x128xf32>
    %cst_171 = arith.constant 0.000000e+00 : f32
    %664 = vector.broadcast %cst_171 : f32 to vector<8x128xf32>
    %665 = arith.maximumf %663, %664 : vector<8x128xf32>
    %c45_172 = arith.constant 45 : index
    %666 = memref.load %arg6[%c45_172] : memref<48xf32, #tpu.memory_space<smem>>
    %667 = vector.broadcast %666 : f32 to vector<8x128xf32>
    %668 = arith.mulf %665, %667 : vector<8x128xf32>
    %669 = arith.addf %657, %668 : vector<8x128xf32>
    %c46 = arith.constant 46 : index
    %670 = memref.load %arg4[%c46] : memref<48xf32, #tpu.memory_space<smem>>
    %671 = vector.broadcast %670 : f32 to vector<8x128xf32>
    %672 = arith.mulf %494, %671 : vector<8x128xf32>
    %c46_173 = arith.constant 46 : index
    %673 = memref.load %arg5[%c46_173] : memref<48xf32, #tpu.memory_space<smem>>
    %674 = vector.broadcast %673 : f32 to vector<8x128xf32>
    %675 = arith.addf %672, %674 : vector<8x128xf32>
    %cst_174 = arith.constant 0.000000e+00 : f32
    %676 = vector.broadcast %cst_174 : f32 to vector<8x128xf32>
    %677 = arith.maximumf %675, %676 : vector<8x128xf32>
    %c46_175 = arith.constant 46 : index
    %678 = memref.load %arg6[%c46_175] : memref<48xf32, #tpu.memory_space<smem>>
    %679 = vector.broadcast %678 : f32 to vector<8x128xf32>
    %680 = arith.mulf %677, %679 : vector<8x128xf32>
    %681 = arith.addf %669, %680 : vector<8x128xf32>
    %c47 = arith.constant 47 : index
    %682 = memref.load %arg4[%c47] : memref<48xf32, #tpu.memory_space<smem>>
    %683 = vector.broadcast %682 : f32 to vector<8x128xf32>
    %684 = arith.mulf %494, %683 : vector<8x128xf32>
    %c47_176 = arith.constant 47 : index
    %685 = memref.load %arg5[%c47_176] : memref<48xf32, #tpu.memory_space<smem>>
    %686 = vector.broadcast %685 : f32 to vector<8x128xf32>
    %687 = arith.addf %684, %686 : vector<8x128xf32>
    %cst_177 = arith.constant 0.000000e+00 : f32
    %688 = vector.broadcast %cst_177 : f32 to vector<8x128xf32>
    %689 = arith.maximumf %687, %688 : vector<8x128xf32>
    %c47_178 = arith.constant 47 : index
    %690 = memref.load %arg6[%c47_178] : memref<48xf32, #tpu.memory_space<smem>>
    %691 = vector.broadcast %690 : f32 to vector<8x128xf32>
    %692 = arith.mulf %689, %691 : vector<8x128xf32>
    %693 = arith.addf %681, %692 : vector<8x128xf32>
    %c2_179 = arith.constant 2 : index
    %694 = memref.load %arg7[%c2_179] : memref<3xf32, #tpu.memory_space<smem>>
    %695 = vector.broadcast %694 : f32 to vector<8x128xf32>
    %696 = arith.addf %693, %695 : vector<8x128xf32>
    %cst_180 = arith.constant 5.000000e+00 : f32
    %697 = vector.broadcast %cst_180 : f32 to vector<8x128xf32>
    %698 = arith.mulf %697, %696 : vector<8x128xf32>
    %699 = arith.subf %485, %494 : vector<8x128xf32>
    %700 = math.exp %699 : vector<8x128xf32>
    %cst_181 = arith.constant 1.000000e+00 : f32
    %701 = vector.broadcast %cst_181 : f32 to vector<8x128xf32>
    %702 = arith.addf %701, %700 : vector<8x128xf32>
    %703 = tpu.reciprocal %702 {approx = true} : vector<8x128xf32> -> vector<8x128xf32>
    %cst_182 = arith.constant 1.000000e+00 : f32
    %704 = vector.broadcast %cst_182 : f32 to vector<8x128xf32>
    %705 = arith.subf %704, %703 : vector<8x128xf32>
    %706 = arith.addf %485, %494 : vector<8x128xf32>
    %707 = arith.mulf %706, %11 : vector<8x128xf32>
    %708 = vector.shape_cast %707 : vector<8x128xf32> to vector<1x8x128xf32>
    %cst_183 = arith.constant dense<0.000000e+00> : vector<1xf32>
    %709 = vector.multi_reduction <add>, %708, %cst_183 [1, 2] : vector<1x8x128xf32> to vector<1xf32>
    %710 = vector.shape_cast %709 : vector<1xf32> to vector<1x1x1xf32>
    %711 = vector.extract %710[0, 0, 0] : f32 from vector<1x1x1xf32>
    %712 = vector.broadcast %502 : f32 to vector<8x128xf32>
    %713 = arith.subf %698, %712 : vector<8x128xf32>
    %714 = arith.subf %711, %16 : f32
    %cst_184 = arith.constant 1.000000e-03 : f32
    %715 = arith.mulf %cst_184, %714 : f32
    %716 = vector.broadcast %715 : f32 to vector<8x128xf32>
    %717 = arith.subf %713, %716 : vector<8x128xf32>
    %718 = arith.mulf %18, %705 : vector<8x128xf32>
    %cst_185 = arith.constant 0.00333333341 : f32
    %719 = vector.broadcast %cst_185 : f32 to vector<8x128xf32>
    %720 = arith.mulf %718, %719 : vector<8x128xf32>
    %721 = arith.subf %717, %720 : vector<8x128xf32>
    %cst_186 = arith.constant 1.000000e+00 : f32
    %722 = vector.broadcast %cst_186 : f32 to vector<8x128xf32>
    %723 = arith.mulf %722, %485 : vector<8x128xf32>
    %724 = arith.addf %721, %723 : vector<8x128xf32>
    %cst_187 = arith.constant 0.166666672 : f32
    %725 = vector.broadcast %cst_187 : f32 to vector<8x128xf32>
    %726 = arith.mulf %724, %725 : vector<8x128xf32>
    %727 = arith.mulf %1, %703 : vector<8x128xf32>
    %cst_188 = arith.constant 0.00333333341 : f32
    %728 = vector.broadcast %cst_188 : f32 to vector<8x128xf32>
    %729 = arith.mulf %727, %728 : vector<8x128xf32>
    %730 = arith.subf %717, %729 : vector<8x128xf32>
    %cst_189 = arith.constant 1.000000e+00 : f32
    %731 = vector.broadcast %cst_189 : f32 to vector<8x128xf32>
    %732 = arith.mulf %731, %494 : vector<8x128xf32>
    %733 = arith.addf %730, %732 : vector<8x128xf32>
    %cst_190 = arith.constant 0.166666672 : f32
    %734 = vector.broadcast %cst_190 : f32 to vector<8x128xf32>
    %735 = arith.mulf %733, %734 : vector<8x128xf32>
    %c0_191 = arith.constant 0 : index
    %c0_192 = arith.constant 0 : index
    %736 = vector.load %arg8[%c0_191, %c0_192] : memref<8x128xf32, #tpu.memory_space<vmem>>, vector<8x128xf32>
    tpu.vector_store %arg8[%c0_191, %c0_192], %726 {strides = array<i32>} : memref<8x128xf32, #tpu.memory_space<vmem>>, vector<8x128xf32>,
    %c0_193 = arith.constant 0 : index
    %c0_194 = arith.constant 0 : index
    %737 = vector.load %arg9[%c0_193, %c0_194] : memref<8x128xf32, #tpu.memory_space<vmem>>, vector<8x128xf32>
    tpu.vector_store %arg9[%c0_193, %c0_194], %735 {strides = array<i32>} : memref<8x128xf32, #tpu.memory_space<vmem>>, vector<8x128xf32>,
    return
  }
  func.func @transform_0(%arg0: i32) -> (i32, i32) {
    %c0_i32 = arith.constant 0 : i32
    %c0_i32_0 = arith.constant 0 : i32
    %c0_i32_1 = arith.constant 0 : i32
    return %c0_i32, %c0_i32_0 : i32, i32
  }
  func.func @transform_1(%arg0: i32) -> (i32, i32) {
    %c0_i32 = arith.constant 0 : i32
    %c0_i32_0 = arith.constant 0 : i32
    %c0_i32_1 = arith.constant 0 : i32
    return %c0_i32, %c0_i32_0 : i32, i32
  }
  func.func @transform_2(%arg0: i32) -> i32 {
    %c0_i32 = arith.constant 0 : i32
    %c0_i32_0 = arith.constant 0 : i32
    return %c0_i32 : i32
  }
  func.func @transform_3(%arg0: i32) -> i32 {
    %c0_i32 = arith.constant 0 : i32
    %c0_i32_0 = arith.constant 0 : i32
    return %c0_i32 : i32
  }
  func.func @transform_4(%arg0: i32) -> i32 {
    %c0_i32 = arith.constant 0 : i32
    %c0_i32_0 = arith.constant 0 : i32
    return %c0_i32 : i32
  }
  func.func @transform_5(%arg0: i32) -> i32 {
    %c0_i32 = arith.constant 0 : i32
    %c0_i32_0 = arith.constant 0 : i32
    return %c0_i32 : i32
  }
  func.func @transform_6(%arg0: i32) -> i32 {
    %c0_i32 = arith.constant 0 : i32
    %c0_i32_0 = arith.constant 0 : i32
    return %c0_i32 : i32
  }
  func.func @transform_7(%arg0: i32) -> (i32, i32) {
    %c0_i32 = arith.constant 0 : i32
    %c0_i32_0 = arith.constant 0 : i32
    %c0_i32_1 = arith.constant 0 : i32
    return %c0_i32, %c0_i32_0 : i32, i32
  }
  func.func @transform_8(%arg0: i32) -> (i32, i32) {
    %c0_i32 = arith.constant 0 : i32
    %c0_i32_0 = arith.constant 0 : i32
    %c0_i32_1 = arith.constant 0 : i32
    return %c0_i32, %c0_i32_0 : i32, i32
  }
}

</mosaic_0001>

<llo_original>
// kernel: tpu_custom_call.1
$region0: #{tpu_custom_call.1}
  #allocation0 [shape = 'u32[]', space=smem, size = 0x4, offset = 0x4, fixed_abs, tag = 'smem constant byte address 0x4 - core index']
  #allocation1 [shape = 'u32[144,128]{1,0:T(1,128)}', space=vmem, size = 0x12000, scoped, tag = 'internal scratch']
  #allocation2 [shape = 'f32[1]{0:T(128)S(6)}', space=smem, size = 0x200, scoped, tag = 'scoped memory for tpu_custom_call.1']
  %s0 = inlined_call_operand.hbm [shape: f32[8,128], index: 0, kind: input, shape index: {}]
  %s1 = inlined_call_operand.hbm [shape: f32[8,128], index: 1, kind: input, shape index: {}]
  %s2 = inlined_call_operand.<no memory space> [shape: f32[1], index: 2, kind: input, shape index: {}]
  %s3 = inlined_call_operand.vmem [shape: f32[48], index: 3, kind: input, shape index: {}]
  %s4 = inlined_call_operand.vmem [shape: f32[48], index: 4, kind: input, shape index: {}]
  %s5 = inlined_call_operand.vmem [shape: f32[48], index: 5, kind: input, shape index: {}]
  %s6 = inlined_call_operand.vmem [shape: f32[3], index: 6, kind: input, shape index: {}]
  %s7 = inlined_call_operand.hbm [shape: f32[8,128], index: 7, kind: output, shape index: {0}]
  %s8 = inlined_call_operand.hbm [shape: f32[8,128], index: 8, kind: output, shape index: {1}]
  %9 = xla_tuple %s7, %s8
  %s10 = sld [smem:[#allocation0]]
  $region70: #{tpu_custom_call.1} parent=0
    _
  %s12 = ssub.s32 1, %s10
  %s13 = scalar_select 0, %s12, %s10
  %14 = sst [smem:[#allocation2]] %s2
  $region1: #{tpu_custom_call.1} parent=0
    #allocation3 [shape = 'u8[4096]{0}', space=vmem, size = 0x1000, scoped, tag = 'input window, operand 0, single buffered']
    #allocation4 [shape = 's32[1]{0}', space=sflag, size = 0x4, scoped, tag = 'scoped memory for tpu_custom_call.1']
    #allocation5 [shape = 's32[1]{0}', space=sflag, size = 0x4, scoped, tag = 'scoped memory for tpu_custom_call.1']
    #allocation6 [shape = 's32[1]{0}', space=sflag, size = 0x4, scoped, tag = 'scoped memory for tpu_custom_call.1']
    #allocation7 [shape = 'u8[4096]{0}', space=vmem, size = 0x1000, scoped, tag = 'input window, operand 1, single buffered']
    #allocation8 [shape = 's32[1]{0}', space=sflag, size = 0x4, scoped, tag = 'scoped memory for tpu_custom_call.1']
    #allocation9 [shape = 'u8[512]{0}', space=smem, size = 0x200, scoped, tag = 'input window, operand 3, single buffered']
    #allocation10 [shape = 'u8[512]{0}', space=smem, size = 0x200, scoped, tag = 'input window, operand 4, single buffered']
    #allocation11 [shape = 's32[1]{0}', space=sflag, size = 0x4, scoped, tag = 'scoped memory for tpu_custom_call.1']
    #allocation12 [shape = 'u8[512]{0}', space=smem, size = 0x200, scoped, tag = 'input window, operand 5, single buffered']
    #allocation13 [shape = 'u8[512]{0}', space=smem, size = 0x200, scoped, tag = 'input window, operand 6, single buffered']
    #allocation14 [shape = 's32[1]{0}', space=sflag, size = 0x4, scoped, tag = 'scoped memory for tpu_custom_call.1']
    #allocation15 [shape = 'u8[4096]{0}', space=vmem, size = 0x1000, scoped, tag = 'output window, operand 0, single buffered']
    #allocation16 [shape = 'u8[4096]{0}', space=vmem, size = 0x1000, scoped, tag = 'output window, operand 1, single buffered']
    #allocation17 [shape = 's32[1]{0}', space=sflag, size = 0x4, scoped, tag = 'scoped memory for tpu_custom_call.1']
    %15 = vsyncpa [#allocation4], 0
    %16 = vsyncpa [#allocation8], 0
    %17 = vsyncpa [#allocation6], 0
    %18 = vsyncpa [#allocation11], 0
    %19 = vsyncpa [#allocation14], 0
    %20 = vsyncpa [#allocation5], 0
    %21 = vsyncpa [#allocation17], 0
    // Predicated region
    $region2: #{tpu_custom_call.1} parent=1 // pred_check
      _
    $region3: #{tpu_custom_call.1} parent=1 // pred_check_branch
      %23 = sbr.rel (0) target = $region5
    $region4: #{tpu_custom_call.1} parent=1 // pred_region
      %s25 = ssub.s32 128, 128
      %26 = vsyncadd [#allocation4], %s25
      %s28 = sshll.u32 [#allocation3], 4
      %s29 = int_to_ptr.vmem [resolvable:$true] %s28
      %31 = dma.hbm_to_vmem [thread:$0]  %s0, 128, %s29, [#allocation4]
    $region5: #{tpu_custom_call.1} parent=1 // pred_fallthru
      _
    // Predicated region
    $region6: #{tpu_custom_call.1} parent=1 // pred_check
      _
    $region7: #{tpu_custom_call.1} parent=1 // pred_check_branch
      %33 = sbr.rel (0) target = $region9
    $region8: #{tpu_custom_call.1} parent=1 // pred_region
      %s35 = ssub.s32 128, 128
      %36 = vsyncadd [#allocation8], %s35
      %s38 = sshll.u32 [#allocation7], 4
      %s39 = int_to_ptr.vmem [resolvable:$true] %s38
      %41 = dma.hbm_to_vmem [thread:$0]  %s1, 128, %s39, [#allocation8]
    $region9: #{tpu_custom_call.1} parent=1 // pred_fallthru
      _
    // Predicated region
    $region10: #{tpu_custom_call.1} parent=1 // pred_check
      _
    $region11: #{tpu_custom_call.1} parent=1 // pred_check_branch
      %43 = sbr.rel (0) target = $region13
    $region12: #{tpu_custom_call.1} parent=1 // pred_region
      _
    $region13: #{tpu_custom_call.1} parent=1 // pred_fallthru
      _
    // Predicated region
    $region14: #{tpu_custom_call.1} parent=1 // pred_check
      _
    $region15: #{tpu_custom_call.1} parent=1 // pred_check_branch
      %45 = sbr.rel (0) target = $region17
    $region16: #{tpu_custom_call.1} parent=1 // pred_region
      %s47 = ssub.s32 16, 16
      %48 = vsyncadd [#allocation6], %s47
      %s50 = sshll.u32 %s3, 4
      %s51 = int_to_ptr.vmem [resolvable:$true] %s50
      %53 = dma.vmem_to_smem %s51, 16, [#allocation9], [#allocation6]
    $region17: #{tpu_custom_call.1} parent=1 // pred_fallthru
      _
    // Predicated region
    $region18: #{tpu_custom_call.1} parent=1 // pred_check
      _
    $region19: #{tpu_custom_call.1} parent=1 // pred_check_branch
      %55 = sbr.rel (0) target = $region21
    $region20: #{tpu_custom_call.1} parent=1 // pred_region
      %s57 = ssub.s32 16, 16
      %58 = vsyncadd [#allocation11], %s57
      %s60 = sshll.u32 %s4, 4
      %s61 = int_to_ptr.vmem [resolvable:$true] %s60
      %63 = dma.vmem_to_smem %s61, 16, [#allocation10], [#allocation11]
    $region21: #{tpu_custom_call.1} parent=1 // pred_fallthru
      _
    // Predicated region
    $region22: #{tpu_custom_call.1} parent=1 // pred_check
      _
    $region23: #{tpu_custom_call.1} parent=1 // pred_check_branch
      %65 = sbr.rel (0) target = $region25
    $region24: #{tpu_custom_call.1} parent=1 // pred_region
      %s67 = ssub.s32 16, 16
      %68 = vsyncadd [#allocation11], %s67
      %s70 = sshll.u32 %s5, 4
      %s71 = int_to_ptr.vmem [resolvable:$true] %s70
      %73 = dma.vmem_to_smem %s71, 16, [#allocation12], [#allocation11]
    $region25: #{tpu_custom_call.1} parent=1 // pred_fallthru
      _
    // Predicated region
    $region26: #{tpu_custom_call.1} parent=1 // pred_check
      _
    $region27: #{tpu_custom_call.1} parent=1 // pred_check_branch
      %75 = sbr.rel (0) target = $region29
    $region28: #{tpu_custom_call.1} parent=1 // pred_region
      %s77 = ssub.s32 16, 16
      %78 = vsyncadd [#allocation14], %s77
      %s80 = sshll.u32 %s6, 4
      %s81 = int_to_ptr.vmem [resolvable:$true] %s80
      %83 = dma.vmem_to_smem %s81, 16, [#allocation13], [#allocation14]
    $region29: #{tpu_custom_call.1} parent=1 // pred_fallthru
      _
    // Predicated region
    $region30: #{tpu_custom_call.1} parent=1 // pred_check
      _
    $region31: #{tpu_custom_call.1} parent=1 // pred_check_branch
      %85 = sbr.rel (0) target = $region33
    $region32: #{tpu_custom_call.1} parent=1 // pred_region
      %86 = dma.done [#allocation4], 128
    $region33: #{tpu_custom_call.1} parent=1 // pred_fallthru
      _
    // Predicated region
    $region34: #{tpu_custom_call.1} parent=1 // pred_check
      _
    $region35: #{tpu_custom_call.1} parent=1 // pred_check_branch
      %88 = sbr.rel (0) target = $region37
    $region36: #{tpu_custom_call.1} parent=1 // pred_region
      %89 = dma.done [#allocation8], 128
    $region37: #{tpu_custom_call.1} parent=1 // pred_fallthru
      _
    // Predicated region
    $region38: #{tpu_custom_call.1} parent=1 // pred_check
      _
    $region39: #{tpu_custom_call.1} parent=1 // pred_check_branch
      %91 = sbr.rel (0) target = $region41
    $region40: #{tpu_custom_call.1} parent=1 // pred_region
      %92 = dma.done [#allocation6], 16
    $region41: #{tpu_custom_call.1} parent=1 // pred_fallthru
      _
    // Predicated region
    $region42: #{tpu_custom_call.1} parent=1 // pred_check
      _
    $region43: #{tpu_custom_call.1} parent=1 // pred_check_branch
      %94 = sbr.rel (0) target = $region45
    $region44: #{tpu_custom_call.1} parent=1 // pred_region
      %95 = dma.done [#allocation11], 16
    $region45: #{tpu_custom_call.1} parent=1 // pred_fallthru
      _
    // Predicated region
    $region46: #{tpu_custom_call.1} parent=1 // pred_check
      _
    $region47: #{tpu_custom_call.1} parent=1 // pred_check_branch
      %97 = sbr.rel (0) target = $region49
    $region48: #{tpu_custom_call.1} parent=1 // pred_region
      %98 = dma.done [#allocation11], 16
    $region49: #{tpu_custom_call.1} parent=1 // pred_fallthru
      _
    // Predicated region
    $region50: #{tpu_custom_call.1} parent=1 // pred_check
      _
    $region51: #{tpu_custom_call.1} parent=1 // pred_check_branch
      %100 = sbr.rel (0) target = $region53
    $region52: #{tpu_custom_call.1} parent=1 // pred_region
      %101 = dma.done [#allocation14], 16
    $region53: #{tpu_custom_call.1} parent=1 // pred_fallthru
      _
    %102 = sfence
    %v103 = vld [vmem:[#allocation3] sm:$0xff]
    %v104 = vld [vmem:[#allocation7] sm:$0xff]
    %s105 = sld [smem:[#allocation2]]
    %v106 = vlaneseq
    %v107 = vshrl.u32 %v106, 7
    %v108 = vlaneseq
    %v109 = vand.u32 %v108, 127
    %v110 = vmul.u32 %v107, 128
    %v111 = vadd.s32 %v110, %v109
    %vm112 = vcmp.lt.s32.totalorder %v111, 300
    %v113 = vsel %vm112, 1, 0
    %v114 = vcvt.s32.f32 %v113
    %v115 = vmul.f32 %v104, %v114
    %116 = vadd.xlane.f32.xlu0 %v115
    %v117 = vpop.xlane.xlu0 %116
    %v118 = vrot.slane %v117, 4
    %v119 = vadd.f32 %v117, %v118
    %v120 = vrot.slane %v119, 2
    %v121 = vadd.f32 %v119, %v120
    %v122 = vrot.slane %v121, 1
    %v123 = vadd.f32 %v121, %v122
    %s124 = vtos %v123
    %v125 = vsub.f32 1.0, %v104
    %v126 = vsub.f32 1.0, %v103
    %s127 = sld [smem:[#allocation9]]
    %v128 = vstv %s127
    %v129 = vmul.f32 %v103, %v128
    %s130 = sld [smem:[#allocation10]]
    %v131 = vstv %s130
    %v132 = vadd.f32 %v129, %v131
    %v133 = vmax.f32 %v132, 0.0
    %s134 = sld [smem:[#allocation12]]
    %v135 = vstv %s134
    %v136 = vmul.f32 %v133, %v135
    %s137 = sld [smem:[#allocation9 + $0x1]]
    %v138 = vstv %s137
    %v139 = vmul.f32 %v103, %v138
    %s140 = sld [smem:[#allocation10 + $0x1]]
    %v141 = vstv %s140
    %v142 = vadd.f32 %v139, %v141
    %v143 = vmax.f32 %v142, 0.0
    %s144 = sld [smem:[#allocation12 + $0x1]]
    %v145 = vstv %s144
    %v146 = vmul.f32 %v143, %v145
    %v147 = vadd.f32 %v136, %v146
    %s148 = sld [smem:[#allocation9 + $0x2]]
    %v149 = vstv %s148
    %v150 = vmul.f32 %v103, %v149
    %s151 = sld [smem:[#allocation10 + $0x2]]
    %v152 = vstv %s151
    %v153 = vadd.f32 %v150, %v152
    %v154 = vmax.f32 %v153, 0.0
    %s155 = sld [smem:[#allocation12 + $0x2]]
    %v156 = vstv %s155
    %v157 = vmul.f32 %v154, %v156
    %v158 = vadd.f32 %v147, %v157
    %s159 = sld [smem:[#allocation9 + $0x3]]
    %v160 = vstv %s159
    %v161 = vmul.f32 %v103, %v160
    %s162 = sld [smem:[#allocation10 + $0x3]]
    %v163 = vstv %s162
    %v164 = vadd.f32 %v161, %v163
    %v165 = vmax.f32 %v164, 0.0
    %s166 = sld [smem:[#allocation12 + $0x3]]
    %v167 = vstv %s166
    %v168 = vmul.f32 %v165, %v167
    %v169 = vadd.f32 %v158, %v168
    %s170 = sld [smem:[#allocation9 + $0x4]]
    %v171 = vstv %s170
    %v172 = vmul.f32 %v103, %v171
    %s173 = sld [smem:[#allocation10 + $0x4]]
    %v174 = vstv %s173
    %v175 = vadd.f32 %v172, %v174
    %v176 = vmax.f32 %v175, 0.0
    %s177 = sld [smem:[#allocation12 + $0x4]]
    %v178 = vstv %s177
    %v179 = vmul.f32 %v176, %v178
    %v180 = vadd.f32 %v169, %v179
    %s181 = sld [smem:[#allocation9 + $0x5]]
    %v182 = vstv %s181
    %v183 = vmul.f32 %v103, %v182
    %s184 = sld [smem:[#allocation10 + $0x5]]
    %v185 = vstv %s184
    %v186 = vadd.f32 %v183, %v185
    %v187 = vmax.f32 %v186, 0.0
    %s188 = sld [smem:[#allocation12 + $0x5]]
    %v189 = vstv %s188
    %v190 = vmul.f32 %v187, %v189
    %v191 = vadd.f32 %v180, %v190
    %s192 = sld [smem:[#allocation9 + $0x6]]
    %v193 = vstv %s192
    %v194 = vmul.f32 %v103, %v193
    %s195 = sld [smem:[#allocation10 + $0x6]]
    %v196 = vstv %s195
    %v197 = vadd.f32 %v194, %v196
    %v198 = vmax.f32 %v197, 0.0
    %s199 = sld [smem:[#allocation12 + $0x6]]
    %v200 = vstv %s199
    %v201 = vmul.f32 %v198, %v200
    %v202 = vadd.f32 %v191, %v201
    %s203 = sld [smem:[#allocation9 + $0x7]]
    %v204 = vstv %s203
    %v205 = vmul.f32 %v103, %v204
    %s206 = sld [smem:[#allocation10 + $0x7]]
    %v207 = vstv %s206
    %v208 = vadd.f32 %v205, %v207
    %v209 = vmax.f32 %v208, 0.0
    %s210 = sld [smem:[#allocation12 + $0x7]]
    %v211 = vstv %s210
    %v212 = vmul.f32 %v209, %v211
    %v213 = vadd.f32 %v202, %v212
    %s214 = sld [smem:[#allocation9 + $0x8]]
    %v215 = vstv %s214
    %v216 = vmul.f32 %v103, %v215
    %s217 = sld [smem:[#allocation10 + $0x8]]
    %v218 = vstv %s217
    %v219 = vadd.f32 %v216, %v218
    %v220 = vmax.f32 %v219, 0.0
    %s221 = sld [smem:[#allocation12 + $0x8]]
    %v222 = vstv %s221
    %v223 = vmul.f32 %v220, %v222
    %v224 = vadd.f32 %v213, %v223
    %s225 = sld [smem:[#allocation9 + $0x9]]
    %v226 = vstv %s225
    %v227 = vmul.f32 %v103, %v226
    %s228 = sld [smem:[#allocation10 + $0x9]]
    %v229 = vstv %s228
    %v230 = vadd.f32 %v227, %v229
    %v231 = vmax.f32 %v230, 0.0
    %s232 = sld [smem:[#allocation12 + $0x9]]
    %v233 = vstv %s232
    %v234 = vmul.f32 %v231, %v233
    %v235 = vadd.f32 %v224, %v234
    %s236 = sld [smem:[#allocation9 + $0xa]]
    %v237 = vstv %s236
    %v238 = vmul.f32 %v103, %v237
    %s239 = sld [smem:[#allocation10 + $0xa]]
    %v240 = vstv %s239
    %v241 = vadd.f32 %v238, %v240
    %v242 = vmax.f32 %v241, 0.0
    %s243 = sld [smem:[#allocation12 + $0xa]]
    %v244 = vstv %s243
    %v245 = vmul.f32 %v242, %v244
    %v246 = vadd.f32 %v235, %v245
    %s247 = sld [smem:[#allocation9 + $0xb]]
    %v248 = vstv %s247
    %v249 = vmul.f32 %v103, %v248
    %s250 = sld [smem:[#allocation10 + $0xb]]
    %v251 = vstv %s250
    %v252 = vadd.f32 %v249, %v251
    %v253 = vmax.f32 %v252, 0.0
    %s254 = sld [smem:[#allocation12 + $0xb]]
    %v255 = vstv %s254
    %v256 = vmul.f32 %v253, %v255
    %v257 = vadd.f32 %v246, %v256
    %s258 = sld [smem:[#allocation9 + $0xc]]
    %v259 = vstv %s258
    %v260 = vmul.f32 %v103, %v259
    %s261 = sld [smem:[#allocation10 + $0xc]]
    %v262 = vstv %s261
    %v263 = vadd.f32 %v260, %v262
    %v264 = vmax.f32 %v263, 0.0
    %s265 = sld [smem:[#allocation12 + $0xc]]
    %v266 = vstv %s265
    %v267 = vmul.f32 %v264, %v266
    %v268 = vadd.f32 %v257, %v267
    %s269 = sld [smem:[#allocation9 + $0xd]]
    %v270 = vstv %s269
    %v271 = vmul.f32 %v103, %v270
    %s272 = sld [smem:[#allocation10 + $0xd]]
    %v273 = vstv %s272
    %v274 = vadd.f32 %v271, %v273
    %v275 = vmax.f32 %v274, 0.0
    %s276 = sld [smem:[#allocation12 + $0xd]]
    %v277 = vstv %s276
    %v278 = vmul.f32 %v275, %v277
    %v279 = vadd.f32 %v268, %v278
    %s280 = sld [smem:[#allocation9 + $0xe]]
    %v281 = vstv %s280
    %v282 = vmul.f32 %v103, %v281
    %s283 = sld [smem:[#allocation10 + $0xe]]
    %v284 = vstv %s283
    %v285 = vadd.f32 %v282, %v284
    %v286 = vmax.f32 %v285, 0.0
    %s287 = sld [smem:[#allocation12 + $0xe]]
    %v288 = vstv %s287
    %v289 = vmul.f32 %v286, %v288
    %v290 = vadd.f32 %v279, %v289
    %s291 = sld [smem:[#allocation9 + $0xf]]
    %v292 = vstv %s291
    %v293 = vmul.f32 %v103, %v292
    %s294 = sld [smem:[#allocation10 + $0xf]]
    %v295 = vstv %s294
    %v296 = vadd.f32 %v293, %v295
    %v297 = vmax.f32 %v296, 0.0
    %s298 = sld [smem:[#allocation12 + $0xf]]
    %v299 = vstv %s298
    %v300 = vmul.f32 %v297, %v299
    %v301 = vadd.f32 %v290, %v300
    %s302 = sld [smem:[#allocation13]]
    %v303 = vstv %s302
    %v304 = vadd.f32 %v301, %v303
    %v305 = vmul.f32 %v304, 5.0
    %v306 = vsub.f32 %v126, %v103
    %v307 = vmul.f32 %v306, 1.442695
    %v308 = vpow.pop %v307
    %v309 = vadd.f32 %v308, 1.0
    %v310 = vrcp.pop %v309
    %v311 = vsub.f32 1.0, %v310
    %v312 = vadd.f32 %v126, %v103
    %v313 = vmul.f32 %v312, %v114
    %314 = vadd.xlane.f32.xlu0 %v313
    %v315 = vpop.xlane.xlu0 %314
    %v316 = vrot.slane %v315, 4
    %v317 = vadd.f32 %v315, %v316
    %v318 = vrot.slane %v317, 2
    %v319 = vadd.f32 %v317, %v318
    %v320 = vrot.slane %v319, 1
    %v321 = vadd.f32 %v319, %v320
    %s322 = vtos %v321
    %v323 = vstv %s105
    %v324 = vsub.f32 %v305, %v323
    %s325 = ssub.f32 %s322, %s124
    %s326 = smul.f32 %s325, 0.001
    %v327 = vstv %s326
    %v328 = vsub.f32 %v324, %v327
    %v329 = vmul.f32 %v125, %v311
    %v330 = vmul.f32 %v329, 0.0033333334
    %v331 = vsub.f32 %v328, %v330
    %v332 = vadd.f32 %v331, %v126
    %v333 = vmul.f32 %v332, 0.16666667
    %v334 = vmul.f32 %v104, %v310
    %v335 = vmul.f32 %v334, 0.0033333334
    %v336 = vsub.f32 %v328, %v335
    %v337 = vadd.f32 %v336, %v103
    %v338 = vmul.f32 %v337, 0.16666667
    %v339 = vmul.f32 %v338, %v114
    %340 = vadd.xlane.f32.xlu0 %v339
    %v341 = vpop.xlane.xlu0 %340
    %v342 = vrot.slane %v341, 4
    %v343 = vadd.f32 %v341, %v342
    %v344 = vrot.slane %v343, 2
    %v345 = vadd.f32 %v343, %v344
    %v346 = vrot.slane %v345, 1
    %v347 = vadd.f32 %v345, %v346
    %s348 = vtos %v347
    %s349 = ssub.f32 %s348, %s124
    %s350 = smul.f32 %s349, 0.001
    %s351 = sadd.f32 %s105, %s350
    %s352 = sld [smem:[#allocation9 + $0x10]]
    %v353 = vstv %s352
    %v354 = vmul.f32 %v338, %v353
    %s355 = sld [smem:[#allocation10 + $0x10]]
    %v356 = vstv %s355
    %v357 = vadd.f32 %v354, %v356
    %v358 = vmax.f32 %v357, 0.0
    %s359 = sld [smem:[#allocation12 + $0x10]]
    %v360 = vstv %s359
    %v361 = vmul.f32 %v358, %v360
    %s362 = sld [smem:[#allocation9 + $0x11]]
    %v363 = vstv %s362
    %v364 = vmul.f32 %v338, %v363
    %s365 = sld [smem:[#allocation10 + $0x11]]
    %v366 = vstv %s365
    %v367 = vadd.f32 %v364, %v366
    %v368 = vmax.f32 %v367, 0.0
    %s369 = sld [smem:[#allocation12 + $0x11]]
    %v370 = vstv %s369
    %v371 = vmul.f32 %v368, %v370
    %v372 = vadd.f32 %v361, %v371
    %s373 = sld [smem:[#allocation9 + $0x12]]
    %v374 = vstv %s373
    %v375 = vmul.f32 %v338, %v374
    %s376 = sld [smem:[#allocation10 + $0x12]]
    %v377 = vstv %s376
    %v378 = vadd.f32 %v375, %v377
    %v379 = vmax.f32 %v378, 0.0
    %s380 = sld [smem:[#allocation12 + $0x12]]
    %v381 = vstv %s380
    %v382 = vmul.f32 %v379, %v381
    %v383 = vadd.f32 %v372, %v382
    %s384 = sld [smem:[#allocation9 + $0x13]]
    %v385 = vstv %s384
    %v386 = vmul.f32 %v338, %v385
    %s387 = sld [smem:[#allocation10 + $0x13]]
    %v388 = vstv %s387
    %v389 = vadd.f32 %v386, %v388
    %v390 = vmax.f32 %v389, 0.0
    %s391 = sld [smem:[#allocation12 + $0x13]]
    %v392 = vstv %s391
    %v393 = vmul.f32 %v390, %v392
    %v394 = vadd.f32 %v383, %v393
    %s395 = sld [smem:[#allocation9 + $0x14]]
    %v396 = vstv %s395
    %v397 = vmul.f32 %v338, %v396
    %s398 = sld [smem:[#allocation10 + $0x14]]
    %v399 = vstv %s398
    %v400 = vadd.f32 %v397, %v399
    %v401 = vmax.f32 %v400, 0.0
    %s402 = sld [smem:[#allocation12 + $0x14]]
    %v403 = vstv %s402
    %v404 = vmul.f32 %v401, %v403
    %v405 = vadd.f32 %v394, %v404
    %s406 = sld [smem:[#allocation9 + $0x15]]
    %v407 = vstv %s406
    %v408 = vmul.f32 %v338, %v407
    %s409 = sld [smem:[#allocation10 + $0x15]]
    %v410 = vstv %s409
    %v411 = vadd.f32 %v408, %v410
    %v412 = vmax.f32 %v411, 0.0
    %s413 = sld [smem:[#allocation12 + $0x15]]
    %v414 = vstv %s413
    %v415 = vmul.f32 %v412, %v414
    %v416 = vadd.f32 %v405, %v415
    %s417 = sld [smem:[#allocation9 + $0x16]]
    %v418 = vstv %s417
    %v419 = vmul.f32 %v338, %v418
    %s420 = sld [smem:[#allocation10 + $0x16]]
    %v421 = vstv %s420
    %v422 = vadd.f32 %v419, %v421
    %v423 = vmax.f32 %v422, 0.0
    %s424 = sld [smem:[#allocation12 + $0x16]]
    %v425 = vstv %s424
    %v426 = vmul.f32 %v423, %v425
    %v427 = vadd.f32 %v416, %v426
    %s428 = sld [smem:[#allocation9 + $0x17]]
    %v429 = vstv %s428
    %v430 = vmul.f32 %v338, %v429
    %s431 = sld [smem:[#allocation10 + $0x17]]
    %v432 = vstv %s431
    %v433 = vadd.f32 %v430, %v432
    %v434 = vmax.f32 %v433, 0.0
    %s435 = sld [smem:[#allocation12 + $0x17]]
    %v436 = vstv %s435
    %v437 = vmul.f32 %v434, %v436
    %v438 = vadd.f32 %v427, %v437
    %s439 = sld [smem:[#allocation9 + $0x18]]
    %v440 = vstv %s439
    %v441 = vmul.f32 %v338, %v440
    %s442 = sld [smem:[#allocation10 + $0x18]]
    %v443 = vstv %s442
    %v444 = vadd.f32 %v441, %v443
    %v445 = vmax.f32 %v444, 0.0
    %s446 = sld [smem:[#allocation12 + $0x18]]
    %v447 = vstv %s446
    %v448 = vmul.f32 %v445, %v447
    %v449 = vadd.f32 %v438, %v448
    %s450 = sld [smem:[#allocation9 + $0x19]]
    %v451 = vstv %s450
    %v452 = vmul.f32 %v338, %v451
    %s453 = sld [smem:[#allocation10 + $0x19]]
    %v454 = vstv %s453
    %v455 = vadd.f32 %v452, %v454
    %v456 = vmax.f32 %v455, 0.0
    %s457 = sld [smem:[#allocation12 + $0x19]]
    %v458 = vstv %s457
    %v459 = vmul.f32 %v456, %v458
    %v460 = vadd.f32 %v449, %v459
    %s461 = sld [smem:[#allocation9 + $0x1a]]
    %v462 = vstv %s461
    %v463 = vmul.f32 %v338, %v462
    %s464 = sld [smem:[#allocation10 + $0x1a]]
    %v465 = vstv %s464
    %v466 = vadd.f32 %v463, %v465
    %v467 = vmax.f32 %v466, 0.0
    %s468 = sld [smem:[#allocation12 + $0x1a]]
    %v469 = vstv %s468
    %v470 = vmul.f32 %v467, %v469
    %v471 = vadd.f32 %v460, %v470
    %s472 = sld [smem:[#allocation9 + $0x1b]]
    %v473 = vstv %s472
    %v474 = vmul.f32 %v338, %v473
    %s475 = sld [smem:[#allocation10 + $0x1b]]
    %v476 = vstv %s475
    %v477 = vadd.f32 %v474, %v476
    %v478 = vmax.f32 %v477, 0.0
    %s479 = sld [smem:[#allocation12 + $0x1b]]
    %v480 = vstv %s479
    %v481 = vmul.f32 %v478, %v480
    %v482 = vadd.f32 %v471, %v481
    %s483 = sld [smem:[#allocation9 + $0x1c]]
    %v484 = vstv %s483
    %v485 = vmul.f32 %v338, %v484
    %s486 = sld [smem:[#allocation10 + $0x1c]]
    %v487 = vstv %s486
    %v488 = vadd.f32 %v485, %v487
    %v489 = vmax.f32 %v488, 0.0
    %s490 = sld [smem:[#allocation12 + $0x1c]]
    %v491 = vstv %s490
    %v492 = vmul.f32 %v489, %v491
    %v493 = vadd.f32 %v482, %v492
    %s494 = sld [smem:[#allocation9 + $0x1d]]
    %v495 = vstv %s494
    %v496 = vmul.f32 %v338, %v495
    %s497 = sld [smem:[#allocation10 + $0x1d]]
    %v498 = vstv %s497
    %v499 = vadd.f32 %v496, %v498
    %v500 = vmax.f32 %v499, 0.0
    %s501 = sld [smem:[#allocation12 + $0x1d]]
    %v502 = vstv %s501
    %v503 = vmul.f32 %v500, %v502
    %v504 = vadd.f32 %v493, %v503
    %s505 = sld [smem:[#allocation9 + $0x1e]]
    %v506 = vstv %s505
    %v507 = vmul.f32 %v338, %v506
    %s508 = sld [smem:[#allocation10 + $0x1e]]
    %v509 = vstv %s508
    %v510 = vadd.f32 %v507, %v509
    %v511 = vmax.f32 %v510, 0.0
    %s512 = sld [smem:[#allocation12 + $0x1e]]
    %v513 = vstv %s512
    %v514 = vmul.f32 %v511, %v513
    %v515 = vadd.f32 %v504, %v514
    %s516 = sld [smem:[#allocation9 + $0x1f]]
    %v517 = vstv %s516
    %v518 = vmul.f32 %v338, %v517
    %s519 = sld [smem:[#allocation10 + $0x1f]]
    %v520 = vstv %s519
    %v521 = vadd.f32 %v518, %v520
    %v522 = vmax.f32 %v521, 0.0
    %s523 = sld [smem:[#allocation12 + $0x1f]]
    %v524 = vstv %s523
    %v525 = vmul.f32 %v522, %v524
    %v526 = vadd.f32 %v515, %v525
    %s527 = sld [smem:[#allocation13 + $0x1]]
    %v528 = vstv %s527
    %v529 = vadd.f32 %v526, %v528
    %v530 = vmul.f32 %v529, 5.0
    %v531 = vsub.f32 %v333, %v338
    %v532 = vmul.f32 %v531, 1.442695
    %v533 = vpow.pop %v532
    %v534 = vadd.f32 %v533, 1.0
    %v535 = vrcp.pop %v534
    %v536 = vsub.f32 1.0, %v535
    %v537 = vadd.f32 %v333, %v338
    %v538 = vmul.f32 %v537, %v114
    %539 = vadd.xlane.f32.xlu0 %v538
    %v540 = vpop.xlane.xlu0 %539
    %v541 = vrot.slane %v540, 4
    %v542 = vadd.f32 %v540, %v541
    %v543 = vrot.slane %v542, 2
    %v544 = vadd.f32 %v542, %v543
    %v545 = vrot.slane %v544, 1
    %v546 = vadd.f32 %v544, %v545
    %s547 = vtos %v546
    %v548 = vstv %s351
    %v549 = vsub.f32 %v530, %v548
    %s550 = ssub.f32 %s547, %s124
    %s551 = smul.f32 %s550, 0.001
    %v552 = vstv %s551
    %v553 = vsub.f32 %v549, %v552
    %v554 = vmul.f32 %v125, %v536
    %v555 = vmul.f32 %v554, 0.0033333334
    %v556 = vsub.f32 %v553, %v555
    %v557 = vadd.f32 %v556, %v333
    %v558 = vmul.f32 %v557, 0.16666667
    %v559 = vmul.f32 %v104, %v535
    %v560 = vmul.f32 %v559, 0.0033333334
    %v561 = vsub.f32 %v553, %v560
    %v562 = vadd.f32 %v561, %v338
    %v563 = vmul.f32 %v562, 0.16666667
    %v564 = vmul.f32 %v563, %v114
    %565 = vadd.xlane.f32.xlu0 %v564
    %v566 = vpop.xlane.xlu0 %565
    %v567 = vrot.slane %v566, 4
    %v568 = vadd.f32 %v566, %v567
    %v569 = vrot.slane %v568, 2
    %v570 = vadd.f32 %v568, %v569
    %v571 = vrot.slane %v570, 1
    %v572 = vadd.f32 %v570, %v571
    %s573 = vtos %v572
    %s574 = ssub.f32 %s573, %s124
    %s575 = smul.f32 %s574, 0.001
    %s576 = sadd.f32 %s351, %s575
    %s577 = sld [smem:[#allocation9 + $0x20]]
    %v578 = vstv %s577
    %v579 = vmul.f32 %v563, %v578
    %s580 = sld [smem:[#allocation10 + $0x20]]
    %v581 = vstv %s580
    %v582 = vadd.f32 %v579, %v581
    %v583 = vmax.f32 %v582, 0.0
    %s584 = sld [smem:[#allocation12 + $0x20]]
    %v585 = vstv %s584
    %v586 = vmul.f32 %v583, %v585
    %s587 = sld [smem:[#allocation9 + $0x21]]
    %v588 = vstv %s587
    %v589 = vmul.f32 %v563, %v588
    %s590 = sld [smem:[#allocation10 + $0x21]]
    %v591 = vstv %s590
    %v592 = vadd.f32 %v589, %v591
    %v593 = vmax.f32 %v592, 0.0
    %s594 = sld [smem:[#allocation12 + $0x21]]
    %v595 = vstv %s594
    %v596 = vmul.f32 %v593, %v595
    %v597 = vadd.f32 %v586, %v596
    %s598 = sld [smem:[#allocation9 + $0x22]]
    %v599 = vstv %s598
    %v600 = vmul.f32 %v563, %v599
    %s601 = sld [smem:[#allocation10 + $0x22]]
    %v602 = vstv %s601
    %v603 = vadd.f32 %v600, %v602
    %v604 = vmax.f32 %v603, 0.0
    %s605 = sld [smem:[#allocation12 + $0x22]]
    %v606 = vstv %s605
    %v607 = vmul.f32 %v604, %v606
    %v608 = vadd.f32 %v597, %v607
    %s609 = sld [smem:[#allocation9 + $0x23]]
    %v610 = vstv %s609
    %v611 = vmul.f32 %v563, %v610
    %s612 = sld [smem:[#allocation10 + $0x23]]
    %v613 = vstv %s612
    %v614 = vadd.f32 %v611, %v613
    %v615 = vmax.f32 %v614, 0.0
    %s616 = sld [smem:[#allocation12 + $0x23]]
    %v617 = vstv %s616
    %v618 = vmul.f32 %v615, %v617
    %v619 = vadd.f32 %v608, %v618
    %s620 = sld [smem:[#allocation9 + $0x24]]
    %v621 = vstv %s620
    %v622 = vmul.f32 %v563, %v621
    %s623 = sld [smem:[#allocation10 + $0x24]]
    %v624 = vstv %s623
    %v625 = vadd.f32 %v622, %v624
    %v626 = vmax.f32 %v625, 0.0
    %s627 = sld [smem:[#allocation12 + $0x24]]
    %v628 = vstv %s627
    %v629 = vmul.f32 %v626, %v628
    %v630 = vadd.f32 %v619, %v629
    %s631 = sld [smem:[#allocation9 + $0x25]]
    %v632 = vstv %s631
    %v633 = vmul.f32 %v563, %v632
    %s634 = sld [smem:[#allocation10 + $0x25]]
    %v635 = vstv %s634
    %v636 = vadd.f32 %v633, %v635
    %v637 = vmax.f32 %v636, 0.0
    %s638 = sld [smem:[#allocation12 + $0x25]]
    %v639 = vstv %s638
    %v640 = vmul.f32 %v637, %v639
    %v641 = vadd.f32 %v630, %v640
    %s642 = sld [smem:[#allocation9 + $0x26]]
    %v643 = vstv %s642
    %v644 = vmul.f32 %v563, %v643
    %s645 = sld [smem:[#allocation10 + $0x26]]
    %v646 = vstv %s645
    %v647 = vadd.f32 %v644, %v646
    %v648 = vmax.f32 %v647, 0.0
    %s649 = sld [smem:[#allocation12 + $0x26]]
    %v650 = vstv %s649
    %v651 = vmul.f32 %v648, %v650
    %v652 = vadd.f32 %v641, %v651
    %s653 = sld [smem:[#allocation9 + $0x27]]
    %v654 = vstv %s653
    %v655 = vmul.f32 %v563, %v654
    %s656 = sld [smem:[#allocation10 + $0x27]]
    %v657 = vstv %s656
    %v658 = vadd.f32 %v655, %v657
    %v659 = vmax.f32 %v658, 0.0
    %s660 = sld [smem:[#allocation12 + $0x27]]
    %v661 = vstv %s660
    %v662 = vmul.f32 %v659, %v661
    %v663 = vadd.f32 %v652, %v662
    %s664 = sld [smem:[#allocation9 + $0x28]]
    %v665 = vstv %s664
    %v666 = vmul.f32 %v563, %v665
    %s667 = sld [smem:[#allocation10 + $0x28]]
    %v668 = vstv %s667
    %v669 = vadd.f32 %v666, %v668
    %v670 = vmax.f32 %v669, 0.0
    %s671 = sld [smem:[#allocation12 + $0x28]]
    %v672 = vstv %s671
    %v673 = vmul.f32 %v670, %v672
    %v674 = vadd.f32 %v663, %v673
    %s675 = sld [smem:[#allocation9 + $0x29]]
    %v676 = vstv %s675
    %v677 = vmul.f32 %v563, %v676
    %s678 = sld [smem:[#allocation10 + $0x29]]
    %v679 = vstv %s678
    %v680 = vadd.f32 %v677, %v679
    %v681 = vmax.f32 %v680, 0.0
    %s682 = sld [smem:[#allocation12 + $0x29]]
    %v683 = vstv %s682
    %v684 = vmul.f32 %v681, %v683
    %v685 = vadd.f32 %v674, %v684
    %s686 = sld [smem:[#allocation9 + $0x2a]]
    %v687 = vstv %s686
    %v688 = vmul.f32 %v563, %v687
    %s689 = sld [smem:[#allocation10 + $0x2a]]
    %v690 = vstv %s689
    %v691 = vadd.f32 %v688, %v690
    %v692 = vmax.f32 %v691, 0.0
    %s693 = sld [smem:[#allocation12 + $0x2a]]
    %v694 = vstv %s693
    %v695 = vmul.f32 %v692, %v694
    %v696 = vadd.f32 %v685, %v695
    %s697 = sld [smem:[#allocation9 + $0x2b]]
    %v698 = vstv %s697
    %v699 = vmul.f32 %v563, %v698
    %s700 = sld [smem:[#allocation10 + $0x2b]]
    %v701 = vstv %s700
    %v702 = vadd.f32 %v699, %v701
    %v703 = vmax.f32 %v702, 0.0
    %s704 = sld [smem:[#allocation12 + $0x2b]]
    %v705 = vstv %s704
    %v706 = vmul.f32 %v703, %v705
    %v707 = vadd.f32 %v696, %v706
    %s708 = sld [smem:[#allocation9 + $0x2c]]
    %v709 = vstv %s708
    %v710 = vmul.f32 %v563, %v709
    %s711 = sld [smem:[#allocation10 + $0x2c]]
    %v712 = vstv %s711
    %v713 = vadd.f32 %v710, %v712
    %v714 = vmax.f32 %v713, 0.0
    %s715 = sld [smem:[#allocation12 + $0x2c]]
    %v716 = vstv %s715
    %v717 = vmul.f32 %v714, %v716
    %v718 = vadd.f32 %v707, %v717
    %s719 = sld [smem:[#allocation9 + $0x2d]]
    %v720 = vstv %s719
    %v721 = vmul.f32 %v563, %v720
    %s722 = sld [smem:[#allocation10 + $0x2d]]
    %v723 = vstv %s722
    %v724 = vadd.f32 %v721, %v723
    %v725 = vmax.f32 %v724, 0.0
    %s726 = sld [smem:[#allocation12 + $0x2d]]
    %v727 = vstv %s726
    %v728 = vmul.f32 %v725, %v727
    %v729 = vadd.f32 %v718, %v728
    %s730 = sld [smem:[#allocation9 + $0x2e]]
    %v731 = vstv %s730
    %v732 = vmul.f32 %v563, %v731
    %s733 = sld [smem:[#allocation10 + $0x2e]]
    %v734 = vstv %s733
    %v735 = vadd.f32 %v732, %v734
    %v736 = vmax.f32 %v735, 0.0
    %s737 = sld [smem:[#allocation12 + $0x2e]]
    %v738 = vstv %s737
    %v739 = vmul.f32 %v736, %v738
    %v740 = vadd.f32 %v729, %v739
    %s741 = sld [smem:[#allocation9 + $0x2f]]
    %v742 = vstv %s741
    %v743 = vmul.f32 %v563, %v742
    %s744 = sld [smem:[#allocation10 + $0x2f]]
    %v745 = vstv %s744
    %v746 = vadd.f32 %v743, %v745
    %v747 = vmax.f32 %v746, 0.0
    %s748 = sld [smem:[#allocation12 + $0x2f]]
    %v749 = vstv %s748
    %v750 = vmul.f32 %v747, %v749
    %v751 = vadd.f32 %v740, %v750
    %s752 = sld [smem:[#allocation13 + $0x2]]
    %v753 = vstv %s752
    %v754 = vadd.f32 %v751, %v753
    %v755 = vmul.f32 %v754, 5.0
    %v756 = vsub.f32 %v558, %v563
    %v757 = vmul.f32 %v756, 1.442695
    %v758 = vpow.pop %v757
    %v759 = vadd.f32 %v758, 1.0
    %v760 = vrcp.pop %v759
    %v761 = vsub.f32 1.0, %v760
    %v762 = vadd.f32 %v558, %v563
    %v763 = vmul.f32 %v762, %v114
    %764 = vadd.xlane.f32.xlu0 %v763
    %v765 = vpop.xlane.xlu0 %764
    %v766 = vrot.slane %v765, 4
    %v767 = vadd.f32 %v765, %v766
    %v768 = vrot.slane %v767, 2
    %v769 = vadd.f32 %v767, %v768
    %v770 = vrot.slane %v769, 1
    %v771 = vadd.f32 %v769, %v770
    %s772 = vtos %v771
    %v773 = vstv %s576
    %v774 = vsub.f32 %v755, %v773
    %s775 = ssub.f32 %s772, %s124
    %s776 = smul.f32 %s775, 0.001
    %v777 = vstv %s776
    %v778 = vsub.f32 %v774, %v777
    %v779 = vmul.f32 %v125, %v761
    %v780 = vmul.f32 %v779, 0.0033333334
    %v781 = vsub.f32 %v778, %v780
    %v782 = vadd.f32 %v781, %v558
    %v783 = vmul.f32 %v782, 0.16666667
    %v784 = vmul.f32 %v104, %v760
    %v785 = vmul.f32 %v784, 0.0033333334
    %v786 = vsub.f32 %v778, %v785
    %v787 = vadd.f32 %v786, %v563
    %v788 = vmul.f32 %v787, 0.16666667
    %789 = vst [vmem:[#allocation15] sm:$0xff] %v783
    %790 = vst [vmem:[#allocation16] sm:$0xff] %v788
    // Predicated region
    $region54: #{tpu_custom_call.1} parent=1 // pred_check
      _
    $region55: #{tpu_custom_call.1} parent=1 // pred_check_branch
      %792 = sbr.rel (0) target = $region57
    $region56: #{tpu_custom_call.1} parent=1 // pred_region
      %s794 = ssub.s32 128, 128
      %795 = vsyncadd [#allocation5], %s794
      %s797 = sshll.u32 [#allocation15], 4
      %s798 = int_to_ptr.vmem [resolvable:$true] %s797
      %800 = dma.vmem_to_hbm [thread:$0]  %s798, 128, %s7, [#allocation5]
    $region57: #{tpu_custom_call.1} parent=1 // pred_fallthru
      _
    // Predicated region
    $region58: #{tpu_custom_call.1} parent=1 // pred_check
      _
    $region59: #{tpu_custom_call.1} parent=1 // pred_check_branch
      %802 = sbr.rel (0) target = $region61
    $region60: #{tpu_custom_call.1} parent=1 // pred_region
      %s804 = ssub.s32 128, 128
      %805 = vsyncadd [#allocation17], %s804
      %s807 = sshll.u32 [#allocation16], 4
      %s808 = int_to_ptr.vmem [resolvable:$true] %s807
      %810 = dma.vmem_to_hbm [thread:$0]  %s808, 128, %s8, [#allocation17]
    $region61: #{tpu_custom_call.1} parent=1 // pred_fallthru
      _
    // Predicated region
    $region62: #{tpu_custom_call.1} parent=1 // pred_check
      _
    $region63: #{tpu_custom_call.1} parent=1 // pred_check_branch
      %812 = sbr.rel (0) target = $region65
    $region64: #{tpu_custom_call.1} parent=1 // pred_region
      %813 = dma.done [#allocation5], 128
    $region65: #{tpu_custom_call.1} parent=1 // pred_fallthru
      _
    // Predicated region
    $region66: #{tpu_custom_call.1} parent=1 // pred_check
      _
    $region67: #{tpu_custom_call.1} parent=1 // pred_check_branch
      %815 = sbr.rel (0) target = $region69
    $region68: #{tpu_custom_call.1} parent=1 // pred_region
      %816 = dma.done [#allocation17], 128
    $region69: #{tpu_custom_call.1} parent=1 // pred_fallthru
      _
    %817 = vsyncpa [#allocation4], 1
    %818 = vsyncpa [#allocation8], 1
    %819 = vsyncpa [#allocation5], 1
    %820 = vsyncpa [#allocation17], 1
    %821 = vsyncpa [#allocation6], 1
    %822 = vsyncpa [#allocation11], 1
    %823 = vsyncpa [#allocation14], 1

</llo_original>
